<compile_context>
chip_gen: v5e
topology: v5e:2x2
jax: 0.10.0
libtpu: 0.0.40
codegen_flags: <defaults>
</compile_context>

<pallas_src>
from functools import partial

import jax
import jax.numpy as jnp
from jax.experimental import pallas as pl
from jax.experimental.pallas import tpu as pltpu

LN_EPS = 1e-5
_SQRT_2_OVER_PI = 0.7978845608028654
_BF16 = jnp.bfloat16


def _layernorm(x, w, b):
    # Single-pass statistics: E[x] and E[x^2] are independent reductions
    # (halves the serial XLU reduction chain vs mean -> mean((x - mu)^2)).
    mu = jnp.mean(x, axis=-1, keepdims=True)
    msq = jnp.mean(x * x, axis=-1, keepdims=True)
    var = msq - mu * mu
    return (x - mu) * jax.lax.rsqrt(var + LN_EPS) * w + b


def _gelu(x):
    # tanh-approximation GELU: one EUP tanh instead of a VALU erf polynomial
    # (max diff vs exact erf-GELU ~1e-3, within the bf16-matmul error budget).
    return 0.5 * x * (1.0 + jnp.tanh(_SQRT_2_OVER_PI * (x + 0.044715 * x * x * x)))


def decoder_kernel(
    x_ref,                       # (BB*S, D) f32
    ln1w_ref, ln1b_ref,          # (L, 1, D) f32
    wqv_ref,                     # (L, D, 2*inner) bf16   [Wq.T*scale | Wv.T]
    wkT_ref,                     # (L, inner, D)  bf16    (PyTorch K weight layout)
    woT_ref,                     # (L, inner, D)  bf16
    bo_ref,                      # (L, 1, D) f32
    ln2w_ref, ln2b_ref,          # (L, 1, D) f32
    w1_ref, b1_ref,              # (L, D, 4D) bf16, (L, 1, 4D) f32
    w2_ref, b2_ref,              # (L, 4D, D) bf16, (L, 1, D) f32
    o_ref,                       # (BB*S, D) f32
    *, depth, heads, dim_head, batch_block, seq,
):
    inner = heads * dim_head
    x = x_ref[...]                                   # (M, D) f32, resident across layers

    for layer in range(depth):                       # static unroll: fully fused decoder
        # ---- attention: norm1 -> fused QV proj + pre-transposed K -> per-head
        #      softmax/PV -> single out-proj -> residual (dropout == identity) ----
        xn = _layernorm(x, ln1w_ref[layer], ln1b_ref[layer])
        xn_b = xn.astype(_BF16)
        xnT_b = xn.T.astype(_BF16)                   # ONE transpose per layer (replaces H per-head K transposes)
        # lane-dense fused Q/V projection: (M, D) @ (D, 2*inner)
        qv = jnp.dot(xn_b, wqv_ref[layer], preferred_element_type=jnp.float32)
        # K produced already transposed: (inner, D) @ (D, M) -> (inner, M)
        kT = jnp.dot(wkT_ref[layer], xnT_b, preferred_element_type=jnp.float32)

        outs = []
        for b in range(batch_block):
            r0 = b * seq
            head_outs = []
            for h in range(heads):
                c0 = h * dim_head
                qh = qv[r0:r0 + seq, c0:c0 + dim_head].astype(_BF16)
                vh = qv[r0:r0 + seq, inner + c0:inner + c0 + dim_head].astype(_BF16)
                khT = kT[c0:c0 + dim_head, r0:r0 + seq].astype(_BF16)
                s = jnp.dot(qh, khT, preferred_element_type=jnp.float32)  # scale folded into Wq
                m = jnp.max(s, axis=-1, keepdims=True)
                e = jnp.exp(s - m)
                p = e * pl.reciprocal(jnp.sum(e, axis=-1, keepdims=True), approx=True)
                head_outs.append(jnp.dot(p.astype(_BF16), vh,
                                         preferred_element_type=jnp.float32))
            outs.append(jnp.concatenate(head_outs, axis=-1))              # (S, inner)
        attn = outs[0] if batch_block == 1 else jnp.concatenate(outs, axis=0)
        # single lane-dense output projection: (M, inner) @ (inner, D)
        proj = jnp.dot(attn.astype(_BF16), woT_ref[layer],
                       preferred_element_type=jnp.float32) + bo_ref[layer]
        x = x + proj                                                      # residual 1

        # ---- feed-forward: norm2 -> Linear -> GELU -> Linear -> residual ----
        xn2 = _layernorm(x, ln2w_ref[layer], ln2b_ref[layer])
        h1 = jnp.dot(xn2.astype(_BF16), w1_ref[layer],
                     preferred_element_type=jnp.float32) + b1_ref[layer]
        h2 = jnp.dot(_gelu(h1).astype(_BF16), w2_ref[layer],
                     preferred_element_type=jnp.float32) + b2_ref[layer]
        x = x + h2                                                        # residual 2

    o_ref[...] = x.astype(o_ref.dtype)


@partial(jax.jit, static_argnames=("heads", "dim_head", "batch_block"))
def simple_decoder(x, stacked_params, *, heads, dim_head, batch_block):
    """Full SimpleDecoder forward in a single pallas_call."""
    B, S, D = x.shape
    depth = stacked_params[0].shape[0]
    assert B % batch_block == 0
    nb = B // batch_block
    rows = batch_block * S

    kernel = partial(decoder_kernel, depth=depth, heads=heads, dim_head=dim_head,
                     batch_block=batch_block, seq=S)

    # Weights are tiny (~60 KB total in bf16) so the full stack stays resident.
    # TODO(synk): when scaling dim/depth, block weights over a depth grid axis
    # (or pipeline_mode=pl.Buffered(1)) so VMEM stays bounded on v7x (64 MiB).
    def full(shape):
        nd = len(shape)
        return pl.BlockSpec(shape, lambda b, _nd=nd: (0,) * _nd)

    in_specs = [pl.BlockSpec((rows, D), lambda b: (b, 0))]
    in_specs += [full(p.shape) for p in stacked_params]

    out = pl.pallas_call(
        kernel,
        out_shape=jax.ShapeDtypeStruct((B * S, D), x.dtype),
        grid=(nb,),
        in_specs=in_specs,
        out_specs=pl.BlockSpec((rows, D), lambda b: (b, 0)),
        compiler_params=pltpu.CompilerParams(
            dimension_semantics=("parallel",),
            vmem_limit_bytes=32 * 1024 * 1024),
    )(x.reshape(B * S, D), *stacked_params)
    return out.reshape(B, S, D)


def _batch_block(B):
    """Batch elements per grid step.  v7x has 2 TensorCores -> keep grid=(B,) so
    each core takes a batch element; single-TC v5e/v6e fold the whole batch into
    one grid step (fewer grid steps, 2x the matmul M dimension)."""
    try:
        kind = jax.devices()[0].device_kind.lower()
    except Exception:
        kind = ""
    multi_tc = ("v7" in kind) or ("7x" in kind)
    return 1 if multi_tc else B


def init_layer_params(key, dim, heads, dim_head):
    """Deterministic synthetic parameters, converted to the kernel's fused layout."""
    inner = heads * dim_head
    scale = float(dim_head) ** -0.5
    ks = jax.random.split(key, 6)

    def w(k, shape, s=0.05):
        return jax.random.normal(k, shape, jnp.float32) * s

    ln1w = jnp.ones((1, dim), jnp.float32)
    ln1b = jnp.zeros((1, dim), jnp.float32)
    wqkv = w(ks[0], (dim, 3 * inner))            # y = x @ wqkv (== PyTorch to_qkv.weight.T)
    wo = w(ks[1], (inner, dim))                  # == to_out.weight.T
    bo = w(ks[2], (1, dim), 0.01)
    ln2w = jnp.ones((1, dim), jnp.float32)
    ln2b = jnp.zeros((1, dim), jnp.float32)
    w1 = w(ks[3], (dim, 4 * dim))
    b1 = w(ks[4], (1, 4 * dim), 0.01)
    w2 = w(ks[5], (4 * dim, dim))
    b2 = jnp.zeros((1, dim), jnp.float32)

    wq = wqkv[:, :inner] * scale                 # fold attention scale into Q weights
    wk = wqkv[:, inner:2 * inner]
    wv = wqkv[:, 2 * inner:]

    wqv = jnp.concatenate([wq, wv], axis=-1).astype(_BF16)   # (D, 2*inner), lane-dense
    wkT = wk.T.astype(_BF16)                                  # (inner, D): K produced pre-transposed
    woT = wo.astype(_BF16)                                    # (inner, D)
    w1b = w1.astype(_BF16)
    w2b = w2.astype(_BF16)

    return (ln1w, ln1b, wqv, wkT, woT, bo, ln2w, ln2b, w1b, b1, w2b, b2)


def stack_layer_params(per_layer):
    """Stack each parameter across layers along a new leading depth axis."""
    n = len(per_layer[0])
    return tuple(jnp.stack([lp[i] for lp in per_layer], axis=0) for i in range(n))


if __name__ == "__main__":
    # SimpleDecoder(dim=32, depth=2, heads=4, dim_head=8), input (B=2, S=8, D=32)
    B, S, D, H, Dh, DEPTH = 2, 8, 32, 4, 8, 2

    key = jax.random.PRNGKey(0)
    kx, kp = jax.random.split(key)
    x = jax.random.normal(kx, (B, S, D), jnp.float32)

    layer_keys = jax.random.split(kp, DEPTH)
    per_layer = [init_layer_params(k, D, H, Dh) for k in layer_keys]
    stacked = stack_layer_params(per_layer)

    bb = _batch_block(B)
    out = simple_decoder(x, stacked, heads=H, dim_head=Dh, batch_block=bb)
    jax.block_until_ready(out)
    assert out.shape == (B, S, D) and out.dtype == jnp.float32
    assert bool(jnp.all(jnp.isfinite(out)))
    print("KERNEL_OK")
</pallas_src>

<mosaic_0001>
module attributes {stable_mosaic.version = 11 : i64} {
  func.func @decoder_kernel(%arg0: i32, %arg1: memref<16x32xf32, #tpu.memory_space<vmem>>, %arg2: memref<2x1x32xf32, #tpu.memory_space<vmem>>, %arg3: memref<2x1x32xf32, #tpu.memory_space<vmem>>, %arg4: memref<2x32x64xbf16, #tpu.memory_space<vmem>>, %arg5: memref<2x32x32xbf16, #tpu.memory_space<vmem>>, %arg6: memref<2x32x32xbf16, #tpu.memory_space<vmem>>, %arg7: memref<2x1x32xf32, #tpu.memory_space<vmem>>, %arg8: memref<2x1x32xf32, #tpu.memory_space<vmem>>, %arg9: memref<2x1x32xf32, #tpu.memory_space<vmem>>, %arg10: memref<2x32x128xbf16, #tpu.memory_space<vmem>>, %arg11: memref<2x1x128xf32, #tpu.memory_space<vmem>>, %arg12: memref<2x128x32xbf16, #tpu.memory_space<vmem>>, %arg13: memref<2x1x32xf32, #tpu.memory_space<vmem>>, %arg14: memref<16x32xf32, #tpu.memory_space<vmem>>) attributes {dimension_semantics = [#tpu.dimension_semantics<parallel>], iteration_bounds = array<i64: 1>, scalar_prefetch = 0 : i64, scratch_operands = 0 : i64, tpu.core_type = #tpu.core_type<tc>, window_params = [{transform_indices = @transform_0, window_bounds = array<i64: 16, 32>}, {pipeline_mode = #tpu.pipeline_mode<synchronous>, transform_indices = @transform_1, window_bounds = array<i64: 2, 1, 32>}, {pipeline_mode = #tpu.pipeline_mode<synchronous>, transform_indices = @transform_2, window_bounds = array<i64: 2, 1, 32>}, {pipeline_mode = #tpu.pipeline_mode<synchronous>, transform_indices = @transform_3, window_bounds = array<i64: 2, 32, 64>}, {pipeline_mode = #tpu.pipeline_mode<synchronous>, transform_indices = @transform_4, window_bounds = array<i64: 2, 32, 32>}, {pipeline_mode = #tpu.pipeline_mode<synchronous>, transform_indices = @transform_5, window_bounds = array<i64: 2, 32, 32>}, {pipeline_mode = #tpu.pipeline_mode<synchronous>, transform_indices = @transform_6, window_bounds = array<i64: 2, 1, 32>}, {pipeline_mode = #tpu.pipeline_mode<synchronous>, transform_indices = @transform_7, window_bounds = array<i64: 2, 1, 32>}, {pipeline_mode = #tpu.pipeline_mode<synchronous>, transform_indices = @transform_8, window_bounds = array<i64: 2, 1, 32>}, {pipeline_mode = #tpu.pipeline_mode<synchronous>, transform_indices = @transform_9, window_bounds = array<i64: 2, 32, 128>}, {pipeline_mode = #tpu.pipeline_mode<synchronous>, transform_indices = @transform_10, window_bounds = array<i64: 2, 1, 128>}, {pipeline_mode = #tpu.pipeline_mode<synchronous>, transform_indices = @transform_11, window_bounds = array<i64: 2, 128, 32>}, {pipeline_mode = #tpu.pipeline_mode<synchronous>, transform_indices = @transform_12, window_bounds = array<i64: 2, 1, 32>}, {transform_indices = @transform_13, window_bounds = array<i64: 16, 32>}]} {
    %c0 = arith.constant 0 : index
    %c0_0 = arith.constant 0 : index
    %0 = vector.load %arg1[%c0, %c0_0] : memref<16x32xf32, #tpu.memory_space<vmem>>, vector<16x32xf32>
    %c0_1 = arith.constant 0 : index
    %c0_2 = arith.constant 0 : index
    %c0_3 = arith.constant 0 : index
    %1 = vector.load %arg2[%c0_1, %c0_2, %c0_3] : memref<2x1x32xf32, #tpu.memory_space<vmem>>, vector<1x1x32xf32>
    %2 = vector.shape_cast %1 : vector<1x1x32xf32> to vector<1x32xf32>
    %c0_4 = arith.constant 0 : index
    %c0_5 = arith.constant 0 : index
    %c0_6 = arith.constant 0 : index
    %3 = vector.load %arg3[%c0_4, %c0_5, %c0_6] : memref<2x1x32xf32, #tpu.memory_space<vmem>>, vector<1x1x32xf32>
    %4 = vector.shape_cast %3 : vector<1x1x32xf32> to vector<1x32xf32>
    %cst = arith.constant dense<0.000000e+00> : vector<16xf32>
    %5 = vector.multi_reduction <add>, %0, %cst [1] : vector<16x32xf32> to vector<16xf32>
    %6 = vector.shape_cast %5 : vector<16xf32> to vector<16x1xf32>
    %cst_7 = arith.constant 3.200000e+01 : f32
    %7 = vector.broadcast %cst_7 : f32 to vector<16x1xf32>
    %8 = arith.divf %6, %7 : vector<16x1xf32>
    %9 = arith.mulf %0, %0 : vector<16x32xf32>
    %cst_8 = arith.constant dense<0.000000e+00> : vector<16xf32>
    %10 = vector.multi_reduction <add>, %9, %cst_8 [1] : vector<16x32xf32> to vector<16xf32>
    %11 = vector.shape_cast %10 : vector<16xf32> to vector<16x1xf32>
    %cst_9 = arith.constant 3.200000e+01 : f32
    %12 = vector.broadcast %cst_9 : f32 to vector<16x1xf32>
    %13 = arith.divf %11, %12 : vector<16x1xf32>
    %14 = arith.mulf %8, %8 : vector<16x1xf32>
    %15 = arith.subf %13, %14 : vector<16x1xf32>
    %16 = vector.broadcast %8 : vector<16x1xf32> to vector<16x32xf32>
    %17 = arith.subf %0, %16 : vector<16x32xf32>
    %cst_10 = arith.constant 9.99999974E-6 : f32
    %18 = vector.broadcast %cst_10 : f32 to vector<16x1xf32>
    %19 = arith.addf %15, %18 : vector<16x1xf32>
    %20 = math.rsqrt %19 : vector<16x1xf32>
    %21 = vector.broadcast %20 : vector<16x1xf32> to vector<16x32xf32>
    %22 = arith.mulf %17, %21 : vector<16x32xf32>
    %23 = vector.broadcast %2 : vector<1x32xf32> to vector<16x32xf32>
    %24 = arith.mulf %22, %23 : vector<16x32xf32>
    %25 = vector.broadcast %4 : vector<1x32xf32> to vector<16x32xf32>
    %26 = arith.addf %24, %25 : vector<16x32xf32>
    %27 = arith.truncf %26 : vector<16x32xf32> to vector<16x32xbf16>
    %28 = tpu.transpose %26, [1, 0] : vector<16x32xf32> -> vector<32x16xf32>
    %29 = arith.truncf %28 : vector<32x16xf32> to vector<32x16xbf16>
    %c0_11 = arith.constant 0 : index
    %c0_12 = arith.constant 0 : index
    %c0_13 = arith.constant 0 : index
    %30 = vector.load %arg4[%c0_11, %c0_12, %c0_13] : memref<2x32x64xbf16, #tpu.memory_space<vmem>>, vector<1x32x64xbf16>
    %31 = vector.shape_cast %30 : vector<1x32x64xbf16> to vector<32x64xbf16>
    %cst_14 = arith.constant dense<0.000000e+00> : vector<16x64xf32>
    %32 = tpu.matmul %27, %31, %cst_14 {dimension_numbers = #tpu.dot_dimension_numbers<[1], [0], [0], [1], [0, 0, 1, 1], [], []>} : vector<16x32xbf16>, vector<32x64xbf16>, vector<16x64xf32> -> vector<16x64xf32>
    %c0_15 = arith.constant 0 : index
    %c0_16 = arith.constant 0 : index
    %c0_17 = arith.constant 0 : index
    %33 = vector.load %arg5[%c0_15, %c0_16, %c0_17] : memref<2x32x32xbf16, #tpu.memory_space<vmem>>, vector<1x32x32xbf16>
    %34 = vector.shape_cast %33 : vector<1x32x32xbf16> to vector<32x32xbf16>
    %cst_18 = arith.constant dense<0.000000e+00> : vector<32x16xf32>
    %35 = tpu.matmul %34, %29, %cst_18 {dimension_numbers = #tpu.dot_dimension_numbers<[1], [0], [0], [1], [0, 0, 1, 1], [], []>} : vector<32x32xbf16>, vector<32x16xbf16>, vector<32x16xf32> -> vector<32x16xf32>
    %36 = vector.extract_strided_slice %32 {offsets = [0, 0], sizes = [8, 8], strides = [1, 1]} : vector<16x64xf32> to vector<8x8xf32>
    %37 = arith.truncf %36 : vector<8x8xf32> to vector<8x8xbf16>
    %38 = vector.extract_strided_slice %32 {offsets = [0, 32], sizes = [8, 8], strides = [1, 1]} : vector<16x64xf32> to vector<8x8xf32>
    %39 = arith.truncf %38 : vector<8x8xf32> to vector<8x8xbf16>
    %40 = vector.extract_strided_slice %35 {offsets = [0, 0], sizes = [8, 8], strides = [1, 1]} : vector<32x16xf32> to vector<8x8xf32>
    %41 = arith.truncf %40 : vector<8x8xf32> to vector<8x8xbf16>
    %cst_19 = arith.constant dense<0.000000e+00> : vector<8x8xf32>
    %42 = tpu.matmul %37, %41, %cst_19 {dimension_numbers = #tpu.dot_dimension_numbers<[1], [0], [0], [1], [0, 0, 1, 1], [], []>} : vector<8x8xbf16>, vector<8x8xbf16>, vector<8x8xf32> -> vector<8x8xf32>
    %cst_20 = arith.constant dense<0xFF800000> : vector<8xf32>
    %43 = vector.multi_reduction <maximumf>, %42, %cst_20 [1] : vector<8x8xf32> to vector<8xf32>
    %44 = vector.shape_cast %43 : vector<8xf32> to vector<8x1xf32>
    %45 = vector.broadcast %44 : vector<8x1xf32> to vector<8x8xf32>
    %46 = arith.subf %42, %45 : vector<8x8xf32>
    %47 = math.exp %46 : vector<8x8xf32>
    %cst_21 = arith.constant dense<0.000000e+00> : vector<8xf32>
    %48 = vector.multi_reduction <add>, %47, %cst_21 [1] : vector<8x8xf32> to vector<8xf32>
    %49 = vector.shape_cast %48 : vector<8xf32> to vector<8x1xf32>
    %50 = tpu.reciprocal %49 {approx = true} : vector<8x1xf32> -> vector<8x1xf32>
    %51 = vector.broadcast %50 : vector<8x1xf32> to vector<8x8xf32>
    %52 = arith.mulf %47, %51 : vector<8x8xf32>
    %53 = arith.truncf %52 : vector<8x8xf32> to vector<8x8xbf16>
    %cst_22 = arith.constant dense<0.000000e+00> : vector<8x8xf32>
    %54 = tpu.matmul %53, %39, %cst_22 {dimension_numbers = #tpu.dot_dimension_numbers<[1], [0], [0], [1], [0, 0, 1, 1], [], []>} : vector<8x8xbf16>, vector<8x8xbf16>, vector<8x8xf32> -> vector<8x8xf32>
    %55 = vector.extract_strided_slice %32 {offsets = [0, 8], sizes = [8, 8], strides = [1, 1]} : vector<16x64xf32> to vector<8x8xf32>
    %56 = arith.truncf %55 : vector<8x8xf32> to vector<8x8xbf16>
    %57 = vector.extract_strided_slice %32 {offsets = [0, 40], sizes = [8, 8], strides = [1, 1]} : vector<16x64xf32> to vector<8x8xf32>
    %58 = arith.truncf %57 : vector<8x8xf32> to vector<8x8xbf16>
    %59 = vector.extract_strided_slice %35 {offsets = [8, 0], sizes = [8, 8], strides = [1, 1]} : vector<32x16xf32> to vector<8x8xf32>
    %60 = arith.truncf %59 : vector<8x8xf32> to vector<8x8xbf16>
    %cst_23 = arith.constant dense<0.000000e+00> : vector<8x8xf32>
    %61 = tpu.matmul %56, %60, %cst_23 {dimension_numbers = #tpu.dot_dimension_numbers<[1], [0], [0], [1], [0, 0, 1, 1], [], []>} : vector<8x8xbf16>, vector<8x8xbf16>, vector<8x8xf32> -> vector<8x8xf32>
    %cst_24 = arith.constant dense<0xFF800000> : vector<8xf32>
    %62 = vector.multi_reduction <maximumf>, %61, %cst_24 [1] : vector<8x8xf32> to vector<8xf32>
    %63 = vector.shape_cast %62 : vector<8xf32> to vector<8x1xf32>
    %64 = vector.broadcast %63 : vector<8x1xf32> to vector<8x8xf32>
    %65 = arith.subf %61, %64 : vector<8x8xf32>
    %66 = math.exp %65 : vector<8x8xf32>
    %cst_25 = arith.constant dense<0.000000e+00> : vector<8xf32>
    %67 = vector.multi_reduction <add>, %66, %cst_25 [1] : vector<8x8xf32> to vector<8xf32>
    %68 = vector.shape_cast %67 : vector<8xf32> to vector<8x1xf32>
    %69 = tpu.reciprocal %68 {approx = true} : vector<8x1xf32> -> vector<8x1xf32>
    %70 = vector.broadcast %69 : vector<8x1xf32> to vector<8x8xf32>
    %71 = arith.mulf %66, %70 : vector<8x8xf32>
    %72 = arith.truncf %71 : vector<8x8xf32> to vector<8x8xbf16>
    %cst_26 = arith.constant dense<0.000000e+00> : vector<8x8xf32>
    %73 = tpu.matmul %72, %58, %cst_26 {dimension_numbers = #tpu.dot_dimension_numbers<[1], [0], [0], [1], [0, 0, 1, 1], [], []>} : vector<8x8xbf16>, vector<8x8xbf16>, vector<8x8xf32> -> vector<8x8xf32>
    %74 = vector.extract_strided_slice %32 {offsets = [0, 16], sizes = [8, 8], strides = [1, 1]} : vector<16x64xf32> to vector<8x8xf32>
    %75 = arith.truncf %74 : vector<8x8xf32> to vector<8x8xbf16>
    %76 = vector.extract_strided_slice %32 {offsets = [0, 48], sizes = [8, 8], strides = [1, 1]} : vector<16x64xf32> to vector<8x8xf32>
    %77 = arith.truncf %76 : vector<8x8xf32> to vector<8x8xbf16>
    %78 = vector.extract_strided_slice %35 {offsets = [16, 0], sizes = [8, 8], strides = [1, 1]} : vector<32x16xf32> to vector<8x8xf32>
    %79 = arith.truncf %78 : vector<8x8xf32> to vector<8x8xbf16>
    %cst_27 = arith.constant dense<0.000000e+00> : vector<8x8xf32>
    %80 = tpu.matmul %75, %79, %cst_27 {dimension_numbers = #tpu.dot_dimension_numbers<[1], [0], [0], [1], [0, 0, 1, 1], [], []>} : vector<8x8xbf16>, vector<8x8xbf16>, vector<8x8xf32> -> vector<8x8xf32>
    %cst_28 = arith.constant dense<0xFF800000> : vector<8xf32>
    %81 = vector.multi_reduction <maximumf>, %80, %cst_28 [1] : vector<8x8xf32> to vector<8xf32>
    %82 = vector.shape_cast %81 : vector<8xf32> to vector<8x1xf32>
    %83 = vector.broadcast %82 : vector<8x1xf32> to vector<8x8xf32>
    %84 = arith.subf %80, %83 : vector<8x8xf32>
    %85 = math.exp %84 : vector<8x8xf32>
    %cst_29 = arith.constant dense<0.000000e+00> : vector<8xf32>
    %86 = vector.multi_reduction <add>, %85, %cst_29 [1] : vector<8x8xf32> to vector<8xf32>
    %87 = vector.shape_cast %86 : vector<8xf32> to vector<8x1xf32>
    %88 = tpu.reciprocal %87 {approx = true} : vector<8x1xf32> -> vector<8x1xf32>
    %89 = vector.broadcast %88 : vector<8x1xf32> to vector<8x8xf32>
    %90 = arith.mulf %85, %89 : vector<8x8xf32>
    %91 = arith.truncf %90 : vector<8x8xf32> to vector<8x8xbf16>
    %cst_30 = arith.constant dense<0.000000e+00> : vector<8x8xf32>
    %92 = tpu.matmul %91, %77, %cst_30 {dimension_numbers = #tpu.dot_dimension_numbers<[1], [0], [0], [1], [0, 0, 1, 1], [], []>} : vector<8x8xbf16>, vector<8x8xbf16>, vector<8x8xf32> -> vector<8x8xf32>
    %93 = vector.extract_strided_slice %32 {offsets = [0, 24], sizes = [8, 8], strides = [1, 1]} : vector<16x64xf32> to vector<8x8xf32>
    %94 = arith.truncf %93 : vector<8x8xf32> to vector<8x8xbf16>
    %95 = vector.extract_strided_slice %32 {offsets = [0, 56], sizes = [8, 8], strides = [1, 1]} : vector<16x64xf32> to vector<8x8xf32>
    %96 = arith.truncf %95 : vector<8x8xf32> to vector<8x8xbf16>
    %97 = vector.extract_strided_slice %35 {offsets = [24, 0], sizes = [8, 8], strides = [1, 1]} : vector<32x16xf32> to vector<8x8xf32>
    %98 = arith.truncf %97 : vector<8x8xf32> to vector<8x8xbf16>
    %cst_31 = arith.constant dense<0.000000e+00> : vector<8x8xf32>
    %99 = tpu.matmul %94, %98, %cst_31 {dimension_numbers = #tpu.dot_dimension_numbers<[1], [0], [0], [1], [0, 0, 1, 1], [], []>} : vector<8x8xbf16>, vector<8x8xbf16>, vector<8x8xf32> -> vector<8x8xf32>
    %cst_32 = arith.constant dense<0xFF800000> : vector<8xf32>
    %100 = vector.multi_reduction <maximumf>, %99, %cst_32 [1] : vector<8x8xf32> to vector<8xf32>
    %101 = vector.shape_cast %100 : vector<8xf32> to vector<8x1xf32>
    %102 = vector.broadcast %101 : vector<8x1xf32> to vector<8x8xf32>
    %103 = arith.subf %99, %102 : vector<8x8xf32>
    %104 = math.exp %103 : vector<8x8xf32>
    %cst_33 = arith.constant dense<0.000000e+00> : vector<8xf32>
    %105 = vector.multi_reduction <add>, %104, %cst_33 [1] : vector<8x8xf32> to vector<8xf32>
    %106 = vector.shape_cast %105 : vector<8xf32> to vector<8x1xf32>
    %107 = tpu.reciprocal %106 {approx = true} : vector<8x1xf32> -> vector<8x1xf32>
    %108 = vector.broadcast %107 : vector<8x1xf32> to vector<8x8xf32>
    %109 = arith.mulf %104, %108 : vector<8x8xf32>
    %110 = arith.truncf %109 : vector<8x8xf32> to vector<8x8xbf16>
    %cst_34 = arith.constant dense<0.000000e+00> : vector<8x8xf32>
    %111 = tpu.matmul %110, %96, %cst_34 {dimension_numbers = #tpu.dot_dimension_numbers<[1], [0], [0], [1], [0, 0, 1, 1], [], []>} : vector<8x8xbf16>, vector<8x8xbf16>, vector<8x8xf32> -> vector<8x8xf32>
    %112 = tpu.concatenate %54, %73, %92, %111 in 1 : vector<8x8xf32>, vector<8x8xf32>, vector<8x8xf32>, vector<8x8xf32> -> vector<8x32xf32>
    %113 = vector.extract_strided_slice %32 {offsets = [8, 0], sizes = [8, 8], strides = [1, 1]} : vector<16x64xf32> to vector<8x8xf32>
    %114 = arith.truncf %113 : vector<8x8xf32> to vector<8x8xbf16>
    %115 = vector.extract_strided_slice %32 {offsets = [8, 32], sizes = [8, 8], strides = [1, 1]} : vector<16x64xf32> to vector<8x8xf32>
    %116 = arith.truncf %115 : vector<8x8xf32> to vector<8x8xbf16>
    %117 = vector.extract_strided_slice %35 {offsets = [0, 8], sizes = [8, 8], strides = [1, 1]} : vector<32x16xf32> to vector<8x8xf32>
    %118 = arith.truncf %117 : vector<8x8xf32> to vector<8x8xbf16>
    %cst_35 = arith.constant dense<0.000000e+00> : vector<8x8xf32>
    %119 = tpu.matmul %114, %118, %cst_35 {dimension_numbers = #tpu.dot_dimension_numbers<[1], [0], [0], [1], [0, 0, 1, 1], [], []>} : vector<8x8xbf16>, vector<8x8xbf16>, vector<8x8xf32> -> vector<8x8xf32>
    %cst_36 = arith.constant dense<0xFF800000> : vector<8xf32>
    %120 = vector.multi_reduction <maximumf>, %119, %cst_36 [1] : vector<8x8xf32> to vector<8xf32>
    %121 = vector.shape_cast %120 : vector<8xf32> to vector<8x1xf32>
    %122 = vector.broadcast %121 : vector<8x1xf32> to vector<8x8xf32>
    %123 = arith.subf %119, %122 : vector<8x8xf32>
    %124 = math.exp %123 : vector<8x8xf32>
    %cst_37 = arith.constant dense<0.000000e+00> : vector<8xf32>
    %125 = vector.multi_reduction <add>, %124, %cst_37 [1] : vector<8x8xf32> to vector<8xf32>
    %126 = vector.shape_cast %125 : vector<8xf32> to vector<8x1xf32>
    %127 = tpu.reciprocal %126 {approx = true} : vector<8x1xf32> -> vector<8x1xf32>
    %128 = vector.broadcast %127 : vector<8x1xf32> to vector<8x8xf32>
    %129 = arith.mulf %124, %128 : vector<8x8xf32>
    %130 = arith.truncf %129 : vector<8x8xf32> to vector<8x8xbf16>
    %cst_38 = arith.constant dense<0.000000e+00> : vector<8x8xf32>
    %131 = tpu.matmul %130, %116, %cst_38 {dimension_numbers = #tpu.dot_dimension_numbers<[1], [0], [0], [1], [0, 0, 1, 1], [], []>} : vector<8x8xbf16>, vector<8x8xbf16>, vector<8x8xf32> -> vector<8x8xf32>
    %132 = vector.extract_strided_slice %32 {offsets = [8, 8], sizes = [8, 8], strides = [1, 1]} : vector<16x64xf32> to vector<8x8xf32>
    %133 = arith.truncf %132 : vector<8x8xf32> to vector<8x8xbf16>
    %134 = vector.extract_strided_slice %32 {offsets = [8, 40], sizes = [8, 8], strides = [1, 1]} : vector<16x64xf32> to vector<8x8xf32>
    %135 = arith.truncf %134 : vector<8x8xf32> to vector<8x8xbf16>
    %136 = vector.extract_strided_slice %35 {offsets = [8, 8], sizes = [8, 8], strides = [1, 1]} : vector<32x16xf32> to vector<8x8xf32>
    %137 = arith.truncf %136 : vector<8x8xf32> to vector<8x8xbf16>
    %cst_39 = arith.constant dense<0.000000e+00> : vector<8x8xf32>
    %138 = tpu.matmul %133, %137, %cst_39 {dimension_numbers = #tpu.dot_dimension_numbers<[1], [0], [0], [1], [0, 0, 1, 1], [], []>} : vector<8x8xbf16>, vector<8x8xbf16>, vector<8x8xf32> -> vector<8x8xf32>
    %cst_40 = arith.constant dense<0xFF800000> : vector<8xf32>
    %139 = vector.multi_reduction <maximumf>, %138, %cst_40 [1] : vector<8x8xf32> to vector<8xf32>
    %140 = vector.shape_cast %139 : vector<8xf32> to vector<8x1xf32>
    %141 = vector.broadcast %140 : vector<8x1xf32> to vector<8x8xf32>
    %142 = arith.subf %138, %141 : vector<8x8xf32>
    %143 = math.exp %142 : vector<8x8xf32>
    %cst_41 = arith.constant dense<0.000000e+00> : vector<8xf32>
    %144 = vector.multi_reduction <add>, %143, %cst_41 [1] : vector<8x8xf32> to vector<8xf32>
    %145 = vector.shape_cast %144 : vector<8xf32> to vector<8x1xf32>
    %146 = tpu.reciprocal %145 {approx = true} : vector<8x1xf32> -> vector<8x1xf32>
    %147 = vector.broadcast %146 : vector<8x1xf32> to vector<8x8xf32>
    %148 = arith.mulf %143, %147 : vector<8x8xf32>
    %149 = arith.truncf %148 : vector<8x8xf32> to vector<8x8xbf16>
    %cst_42 = arith.constant dense<0.000000e+00> : vector<8x8xf32>
    %150 = tpu.matmul %149, %135, %cst_42 {dimension_numbers = #tpu.dot_dimension_numbers<[1], [0], [0], [1], [0, 0, 1, 1], [], []>} : vector<8x8xbf16>, vector<8x8xbf16>, vector<8x8xf32> -> vector<8x8xf32>
    %151 = vector.extract_strided_slice %32 {offsets = [8, 16], sizes = [8, 8], strides = [1, 1]} : vector<16x64xf32> to vector<8x8xf32>
    %152 = arith.truncf %151 : vector<8x8xf32> to vector<8x8xbf16>
    %153 = vector.extract_strided_slice %32 {offsets = [8, 48], sizes = [8, 8], strides = [1, 1]} : vector<16x64xf32> to vector<8x8xf32>
    %154 = arith.truncf %153 : vector<8x8xf32> to vector<8x8xbf16>
    %155 = vector.extract_strided_slice %35 {offsets = [16, 8], sizes = [8, 8], strides = [1, 1]} : vector<32x16xf32> to vector<8x8xf32>
    %156 = arith.truncf %155 : vector<8x8xf32> to vector<8x8xbf16>
    %cst_43 = arith.constant dense<0.000000e+00> : vector<8x8xf32>
    %157 = tpu.matmul %152, %156, %cst_43 {dimension_numbers = #tpu.dot_dimension_numbers<[1], [0], [0], [1], [0, 0, 1, 1], [], []>} : vector<8x8xbf16>, vector<8x8xbf16>, vector<8x8xf32> -> vector<8x8xf32>
    %cst_44 = arith.constant dense<0xFF800000> : vector<8xf32>
    %158 = vector.multi_reduction <maximumf>, %157, %cst_44 [1] : vector<8x8xf32> to vector<8xf32>
    %159 = vector.shape_cast %158 : vector<8xf32> to vector<8x1xf32>
    %160 = vector.broadcast %159 : vector<8x1xf32> to vector<8x8xf32>
    %161 = arith.subf %157, %160 : vector<8x8xf32>
    %162 = math.exp %161 : vector<8x8xf32>
    %cst_45 = arith.constant dense<0.000000e+00> : vector<8xf32>
    %163 = vector.multi_reduction <add>, %162, %cst_45 [1] : vector<8x8xf32> to vector<8xf32>
    %164 = vector.shape_cast %163 : vector<8xf32> to vector<8x1xf32>
    %165 = tpu.reciprocal %164 {approx = true} : vector<8x1xf32> -> vector<8x1xf32>
    %166 = vector.broadcast %165 : vector<8x1xf32> to vector<8x8xf32>
    %167 = arith.mulf %162, %166 : vector<8x8xf32>
    %168 = arith.truncf %167 : vector<8x8xf32> to vector<8x8xbf16>
    %cst_46 = arith.constant dense<0.000000e+00> : vector<8x8xf32>
    %169 = tpu.matmul %168, %154, %cst_46 {dimension_numbers = #tpu.dot_dimension_numbers<[1], [0], [0], [1], [0, 0, 1, 1], [], []>} : vector<8x8xbf16>, vector<8x8xbf16>, vector<8x8xf32> -> vector<8x8xf32>
    %170 = vector.extract_strided_slice %32 {offsets = [8, 24], sizes = [8, 8], strides = [1, 1]} : vector<16x64xf32> to vector<8x8xf32>
    %171 = arith.truncf %170 : vector<8x8xf32> to vector<8x8xbf16>
    %172 = vector.extract_strided_slice %32 {offsets = [8, 56], sizes = [8, 8], strides = [1, 1]} : vector<16x64xf32> to vector<8x8xf32>
    %173 = arith.truncf %172 : vector<8x8xf32> to vector<8x8xbf16>
    %174 = vector.extract_strided_slice %35 {offsets = [24, 8], sizes = [8, 8], strides = [1, 1]} : vector<32x16xf32> to vector<8x8xf32>
    %175 = arith.truncf %174 : vector<8x8xf32> to vector<8x8xbf16>
    %cst_47 = arith.constant dense<0.000000e+00> : vector<8x8xf32>
    %176 = tpu.matmul %171, %175, %cst_47 {dimension_numbers = #tpu.dot_dimension_numbers<[1], [0], [0], [1], [0, 0, 1, 1], [], []>} : vector<8x8xbf16>, vector<8x8xbf16>, vector<8x8xf32> -> vector<8x8xf32>
    %cst_48 = arith.constant dense<0xFF800000> : vector<8xf32>
    %177 = vector.multi_reduction <maximumf>, %176, %cst_48 [1] : vector<8x8xf32> to vector<8xf32>
    %178 = vector.shape_cast %177 : vector<8xf32> to vector<8x1xf32>
    %179 = vector.broadcast %178 : vector<8x1xf32> to vector<8x8xf32>
    %180 = arith.subf %176, %179 : vector<8x8xf32>
    %181 = math.exp %180 : vector<8x8xf32>
    %cst_49 = arith.constant dense<0.000000e+00> : vector<8xf32>
    %182 = vector.multi_reduction <add>, %181, %cst_49 [1] : vector<8x8xf32> to vector<8xf32>
    %183 = vector.shape_cast %182 : vector<8xf32> to vector<8x1xf32>
    %184 = tpu.reciprocal %183 {approx = true} : vector<8x1xf32> -> vector<8x1xf32>
    %185 = vector.broadcast %184 : vector<8x1xf32> to vector<8x8xf32>
    %186 = arith.mulf %181, %185 : vector<8x8xf32>
    %187 = arith.truncf %186 : vector<8x8xf32> to vector<8x8xbf16>
    %cst_50 = arith.constant dense<0.000000e+00> : vector<8x8xf32>
    %188 = tpu.matmul %187, %173, %cst_50 {dimension_numbers = #tpu.dot_dimension_numbers<[1], [0], [0], [1], [0, 0, 1, 1], [], []>} : vector<8x8xbf16>, vector<8x8xbf16>, vector<8x8xf32> -> vector<8x8xf32>
    %189 = tpu.concatenate %131, %150, %169, %188 in 1 : vector<8x8xf32>, vector<8x8xf32>, vector<8x8xf32>, vector<8x8xf32> -> vector<8x32xf32>
    %190 = tpu.concatenate %112, %189 in 0 : vector<8x32xf32>, vector<8x32xf32> -> vector<16x32xf32>
    %191 = arith.truncf %190 : vector<16x32xf32> to vector<16x32xbf16>
    %c0_51 = arith.constant 0 : index
    %c0_52 = arith.constant 0 : index
    %c0_53 = arith.constant 0 : index
    %192 = vector.load %arg6[%c0_51, %c0_52, %c0_53] : memref<2x32x32xbf16, #tpu.memory_space<vmem>>, vector<1x32x32xbf16>
    %193 = vector.shape_cast %192 : vector<1x32x32xbf16> to vector<32x32xbf16>
    %cst_54 = arith.constant dense<0.000000e+00> : vector<16x32xf32>
    %194 = tpu.matmul %191, %193, %cst_54 {dimension_numbers = #tpu.dot_dimension_numbers<[1], [0], [0], [1], [0, 0, 1, 1], [], []>} : vector<16x32xbf16>, vector<32x32xbf16>, vector<16x32xf32> -> vector<16x32xf32>
    %c0_55 = arith.constant 0 : index
    %c0_56 = arith.constant 0 : index
    %c0_57 = arith.constant 0 : index
    %195 = vector.load %arg7[%c0_55, %c0_56, %c0_57] : memref<2x1x32xf32, #tpu.memory_space<vmem>>, vector<1x1x32xf32>
    %196 = vector.shape_cast %195 : vector<1x1x32xf32> to vector<1x32xf32>
    %197 = vector.broadcast %196 : vector<1x32xf32> to vector<16x32xf32>
    %198 = arith.addf %194, %197 : vector<16x32xf32>
    %199 = arith.addf %0, %198 : vector<16x32xf32>
    %c0_58 = arith.constant 0 : index
    %c0_59 = arith.constant 0 : index
    %c0_60 = arith.constant 0 : index
    %200 = vector.load %arg8[%c0_58, %c0_59, %c0_60] : memref<2x1x32xf32, #tpu.memory_space<vmem>>, vector<1x1x32xf32>
    %201 = vector.shape_cast %200 : vector<1x1x32xf32> to vector<1x32xf32>
    %c0_61 = arith.constant 0 : index
    %c0_62 = arith.constant 0 : index
    %c0_63 = arith.constant 0 : index
    %202 = vector.load %arg9[%c0_61, %c0_62, %c0_63] : memref<2x1x32xf32, #tpu.memory_space<vmem>>, vector<1x1x32xf32>
    %203 = vector.shape_cast %202 : vector<1x1x32xf32> to vector<1x32xf32>
    %cst_64 = arith.constant dense<0.000000e+00> : vector<16xf32>
    %204 = vector.multi_reduction <add>, %199, %cst_64 [1] : vector<16x32xf32> to vector<16xf32>
    %205 = vector.shape_cast %204 : vector<16xf32> to vector<16x1xf32>
    %cst_65 = arith.constant 3.200000e+01 : f32
    %206 = vector.broadcast %cst_65 : f32 to vector<16x1xf32>
    %207 = arith.divf %205, %206 : vector<16x1xf32>
    %208 = arith.mulf %199, %199 : vector<16x32xf32>
    %cst_66 = arith.constant dense<0.000000e+00> : vector<16xf32>
    %209 = vector.multi_reduction <add>, %208, %cst_66 [1] : vector<16x32xf32> to vector<16xf32>
    %210 = vector.shape_cast %209 : vector<16xf32> to vector<16x1xf32>
    %cst_67 = arith.constant 3.200000e+01 : f32
    %211 = vector.broadcast %cst_67 : f32 to vector<16x1xf32>
    %212 = arith.divf %210, %211 : vector<16x1xf32>
    %213 = arith.mulf %207, %207 : vector<16x1xf32>
    %214 = arith.subf %212, %213 : vector<16x1xf32>
    %215 = vector.broadcast %207 : vector<16x1xf32> to vector<16x32xf32>
    %216 = arith.subf %199, %215 : vector<16x32xf32>
    %cst_68 = arith.constant 9.99999974E-6 : f32
    %217 = vector.broadcast %cst_68 : f32 to vector<16x1xf32>
    %218 = arith.addf %214, %217 : vector<16x1xf32>
    %219 = math.rsqrt %218 : vector<16x1xf32>
    %220 = vector.broadcast %219 : vector<16x1xf32> to vector<16x32xf32>
    %221 = arith.mulf %216, %220 : vector<16x32xf32>
    %222 = vector.broadcast %201 : vector<1x32xf32> to vector<16x32xf32>
    %223 = arith.mulf %221, %222 : vector<16x32xf32>
    %224 = vector.broadcast %203 : vector<1x32xf32> to vector<16x32xf32>
    %225 = arith.addf %223, %224 : vector<16x32xf32>
    %226 = arith.truncf %225 : vector<16x32xf32> to vector<16x32xbf16>
    %c0_69 = arith.constant 0 : index
    %c0_70 = arith.constant 0 : index
    %c0_71 = arith.constant 0 : index
    %227 = vector.load %arg10[%c0_69, %c0_70, %c0_71] : memref<2x32x128xbf16, #tpu.memory_space<vmem>>, vector<1x32x128xbf16>
    %228 = vector.shape_cast %227 : vector<1x32x128xbf16> to vector<32x128xbf16>
    %cst_72 = arith.constant dense<0.000000e+00> : vector<16x128xf32>
    %229 = tpu.matmul %226, %228, %cst_72 {dimension_numbers = #tpu.dot_dimension_numbers<[1], [0], [0], [1], [0, 0, 1, 1], [], []>} : vector<16x32xbf16>, vector<32x128xbf16>, vector<16x128xf32> -> vector<16x128xf32>
    %c0_73 = arith.constant 0 : index
    %c0_74 = arith.constant 0 : index
    %c0_75 = arith.constant 0 : index
    %230 = vector.load %arg11[%c0_73, %c0_74, %c0_75] : memref<2x1x128xf32, #tpu.memory_space<vmem>>, vector<1x1x128xf32>
    %231 = vector.shape_cast %230 : vector<1x1x128xf32> to vector<1x128xf32>
    %232 = vector.broadcast %231 : vector<1x128xf32> to vector<16x128xf32>
    %233 = arith.addf %229, %232 : vector<16x128xf32>
    %cst_76 = arith.constant 5.000000e-01 : f32
    %234 = vector.broadcast %cst_76 : f32 to vector<16x128xf32>
    %235 = arith.mulf %234, %233 : vector<16x128xf32>
    %cst_77 = arith.constant 4.471500e-02 : f32
    %236 = vector.broadcast %cst_77 : f32 to vector<16x128xf32>
    %237 = arith.mulf %236, %233 : vector<16x128xf32>
    %238 = arith.mulf %237, %233 : vector<16x128xf32>
    %239 = arith.mulf %238, %233 : vector<16x128xf32>
    %240 = arith.addf %233, %239 : vector<16x128xf32>
    %cst_78 = arith.constant 0.797884583 : f32
    %241 = vector.broadcast %cst_78 : f32 to vector<16x128xf32>
    %242 = arith.mulf %241, %240 : vector<16x128xf32>
    %243 = math.tanh %242 : vector<16x128xf32>
    %cst_79 = arith.constant 1.000000e+00 : f32
    %244 = vector.broadcast %cst_79 : f32 to vector<16x128xf32>
    %245 = arith.addf %244, %243 : vector<16x128xf32>
    %246 = arith.mulf %235, %245 : vector<16x128xf32>
    %247 = arith.truncf %246 : vector<16x128xf32> to vector<16x128xbf16>
    %c0_80 = arith.constant 0 : index
    %c0_81 = arith.constant 0 : index
    %c0_82 = arith.constant 0 : index
    %248 = vector.load %arg12[%c0_80, %c0_81, %c0_82] : memref<2x128x32xbf16, #tpu.memory_space<vmem>>, vector<1x128x32xbf16>
    %249 = vector.shape_cast %248 : vector<1x128x32xbf16> to vector<128x32xbf16>
    %cst_83 = arith.constant dense<0.000000e+00> : vector<16x32xf32>
    %250 = tpu.matmul %247, %249, %cst_83 {dimension_numbers = #tpu.dot_dimension_numbers<[1], [0], [0], [1], [0, 0, 1, 1], [], []>} : vector<16x128xbf16>, vector<128x32xbf16>, vector<16x32xf32> -> vector<16x32xf32>
    %c0_84 = arith.constant 0 : index
    %c0_85 = arith.constant 0 : index
    %c0_86 = arith.constant 0 : index
    %251 = vector.load %arg13[%c0_84, %c0_85, %c0_86] : memref<2x1x32xf32, #tpu.memory_space<vmem>>, vector<1x1x32xf32>
    %252 = vector.shape_cast %251 : vector<1x1x32xf32> to vector<1x32xf32>
    %253 = vector.broadcast %252 : vector<1x32xf32> to vector<16x32xf32>
    %254 = arith.addf %250, %253 : vector<16x32xf32>
    %255 = arith.addf %199, %254 : vector<16x32xf32>
    %c1 = arith.constant 1 : index
    %c0_87 = arith.constant 0 : index
    %c0_88 = arith.constant 0 : index
    %256 = vector.load %arg2[%c1, %c0_87, %c0_88] : memref<2x1x32xf32, #tpu.memory_space<vmem>>, vector<1x1x32xf32>
    %257 = vector.shape_cast %256 : vector<1x1x32xf32> to vector<1x32xf32>
    %c1_89 = arith.constant 1 : index
    %c0_90 = arith.constant 0 : index
    %c0_91 = arith.constant 0 : index
    %258 = vector.load %arg3[%c1_89, %c0_90, %c0_91] : memref<2x1x32xf32, #tpu.memory_space<vmem>>, vector<1x1x32xf32>
    %259 = vector.shape_cast %258 : vector<1x1x32xf32> to vector<1x32xf32>
    %cst_92 = arith.constant dense<0.000000e+00> : vector<16xf32>
    %260 = vector.multi_reduction <add>, %255, %cst_92 [1] : vector<16x32xf32> to vector<16xf32>
    %261 = vector.shape_cast %260 : vector<16xf32> to vector<16x1xf32>
    %cst_93 = arith.constant 3.200000e+01 : f32
    %262 = vector.broadcast %cst_93 : f32 to vector<16x1xf32>
    %263 = arith.divf %261, %262 : vector<16x1xf32>
    %264 = arith.mulf %255, %255 : vector<16x32xf32>
    %cst_94 = arith.constant dense<0.000000e+00> : vector<16xf32>
    %265 = vector.multi_reduction <add>, %264, %cst_94 [1] : vector<16x32xf32> to vector<16xf32>
    %266 = vector.shape_cast %265 : vector<16xf32> to vector<16x1xf32>
    %cst_95 = arith.constant 3.200000e+01 : f32
    %267 = vector.broadcast %cst_95 : f32 to vector<16x1xf32>
    %268 = arith.divf %266, %267 : vector<16x1xf32>
    %269 = arith.mulf %263, %263 : vector<16x1xf32>
    %270 = arith.subf %268, %269 : vector<16x1xf32>
    %271 = vector.broadcast %263 : vector<16x1xf32> to vector<16x32xf32>
    %272 = arith.subf %255, %271 : vector<16x32xf32>
    %cst_96 = arith.constant 9.99999974E-6 : f32
    %273 = vector.broadcast %cst_96 : f32 to vector<16x1xf32>
    %274 = arith.addf %270, %273 : vector<16x1xf32>
    %275 = math.rsqrt %274 : vector<16x1xf32>
    %276 = vector.broadcast %275 : vector<16x1xf32> to vector<16x32xf32>
    %277 = arith.mulf %272, %276 : vector<16x32xf32>
    %278 = vector.broadcast %257 : vector<1x32xf32> to vector<16x32xf32>
    %279 = arith.mulf %277, %278 : vector<16x32xf32>
    %280 = vector.broadcast %259 : vector<1x32xf32> to vector<16x32xf32>
    %281 = arith.addf %279, %280 : vector<16x32xf32>
    %282 = arith.truncf %281 : vector<16x32xf32> to vector<16x32xbf16>
    %283 = tpu.transpose %281, [1, 0] : vector<16x32xf32> -> vector<32x16xf32>
    %284 = arith.truncf %283 : vector<32x16xf32> to vector<32x16xbf16>
    %c1_97 = arith.constant 1 : index
    %c0_98 = arith.constant 0 : index
    %c0_99 = arith.constant 0 : index
    %285 = vector.load %arg4[%c1_97, %c0_98, %c0_99] : memref<2x32x64xbf16, #tpu.memory_space<vmem>>, vector<1x32x64xbf16>
    %286 = vector.shape_cast %285 : vector<1x32x64xbf16> to vector<32x64xbf16>
    %cst_100 = arith.constant dense<0.000000e+00> : vector<16x64xf32>
    %287 = tpu.matmul %282, %286, %cst_100 {dimension_numbers = #tpu.dot_dimension_numbers<[1], [0], [0], [1], [0, 0, 1, 1], [], []>} : vector<16x32xbf16>, vector<32x64xbf16>, vector<16x64xf32> -> vector<16x64xf32>
    %c1_101 = arith.constant 1 : index
    %c0_102 = arith.constant 0 : index
    %c0_103 = arith.constant 0 : index
    %288 = vector.load %arg5[%c1_101, %c0_102, %c0_103] : memref<2x32x32xbf16, #tpu.memory_space<vmem>>, vector<1x32x32xbf16>
    %289 = vector.shape_cast %288 : vector<1x32x32xbf16> to vector<32x32xbf16>
    %cst_104 = arith.constant dense<0.000000e+00> : vector<32x16xf32>
    %290 = tpu.matmul %289, %284, %cst_104 {dimension_numbers = #tpu.dot_dimension_numbers<[1], [0], [0], [1], [0, 0, 1, 1], [], []>} : vector<32x32xbf16>, vector<32x16xbf16>, vector<32x16xf32> -> vector<32x16xf32>
    %291 = vector.extract_strided_slice %287 {offsets = [0, 0], sizes = [8, 8], strides = [1, 1]} : vector<16x64xf32> to vector<8x8xf32>
    %292 = arith.truncf %291 : vector<8x8xf32> to vector<8x8xbf16>
    %293 = vector.extract_strided_slice %287 {offsets = [0, 32], sizes = [8, 8], strides = [1, 1]} : vector<16x64xf32> to vector<8x8xf32>
    %294 = arith.truncf %293 : vector<8x8xf32> to vector<8x8xbf16>
    %295 = vector.extract_strided_slice %290 {offsets = [0, 0], sizes = [8, 8], strides = [1, 1]} : vector<32x16xf32> to vector<8x8xf32>
    %296 = arith.truncf %295 : vector<8x8xf32> to vector<8x8xbf16>
    %cst_105 = arith.constant dense<0.000000e+00> : vector<8x8xf32>
    %297 = tpu.matmul %292, %296, %cst_105 {dimension_numbers = #tpu.dot_dimension_numbers<[1], [0], [0], [1], [0, 0, 1, 1], [], []>} : vector<8x8xbf16>, vector<8x8xbf16>, vector<8x8xf32> -> vector<8x8xf32>
    %cst_106 = arith.constant dense<0xFF800000> : vector<8xf32>
    %298 = vector.multi_reduction <maximumf>, %297, %cst_106 [1] : vector<8x8xf32> to vector<8xf32>
    %299 = vector.shape_cast %298 : vector<8xf32> to vector<8x1xf32>
    %300 = vector.broadcast %299 : vector<8x1xf32> to vector<8x8xf32>
    %301 = arith.subf %297, %300 : vector<8x8xf32>
    %302 = math.exp %301 : vector<8x8xf32>
    %cst_107 = arith.constant dense<0.000000e+00> : vector<8xf32>
    %303 = vector.multi_reduction <add>, %302, %cst_107 [1] : vector<8x8xf32> to vector<8xf32>
    %304 = vector.shape_cast %303 : vector<8xf32> to vector<8x1xf32>
    %305 = tpu.reciprocal %304 {approx = true} : vector<8x1xf32> -> vector<8x1xf32>
    %306 = vector.broadcast %305 : vector<8x1xf32> to vector<8x8xf32>
    %307 = arith.mulf %302, %306 : vector<8x8xf32>
    %308 = arith.truncf %307 : vector<8x8xf32> to vector<8x8xbf16>
    %cst_108 = arith.constant dense<0.000000e+00> : vector<8x8xf32>
    %309 = tpu.matmul %308, %294, %cst_108 {dimension_numbers = #tpu.dot_dimension_numbers<[1], [0], [0], [1], [0, 0, 1, 1], [], []>} : vector<8x8xbf16>, vector<8x8xbf16>, vector<8x8xf32> -> vector<8x8xf32>
    %310 = vector.extract_strided_slice %287 {offsets = [0, 8], sizes = [8, 8], strides = [1, 1]} : vector<16x64xf32> to vector<8x8xf32>
    %311 = arith.truncf %310 : vector<8x8xf32> to vector<8x8xbf16>
    %312 = vector.extract_strided_slice %287 {offsets = [0, 40], sizes = [8, 8], strides = [1, 1]} : vector<16x64xf32> to vector<8x8xf32>
    %313 = arith.truncf %312 : vector<8x8xf32> to vector<8x8xbf16>
    %314 = vector.extract_strided_slice %290 {offsets = [8, 0], sizes = [8, 8], strides = [1, 1]} : vector<32x16xf32> to vector<8x8xf32>
    %315 = arith.truncf %314 : vector<8x8xf32> to vector<8x8xbf16>
    %cst_109 = arith.constant dense<0.000000e+00> : vector<8x8xf32>
    %316 = tpu.matmul %311, %315, %cst_109 {dimension_numbers = #tpu.dot_dimension_numbers<[1], [0], [0], [1], [0, 0, 1, 1], [], []>} : vector<8x8xbf16>, vector<8x8xbf16>, vector<8x8xf32> -> vector<8x8xf32>
    %cst_110 = arith.constant dense<0xFF800000> : vector<8xf32>
    %317 = vector.multi_reduction <maximumf>, %316, %cst_110 [1] : vector<8x8xf32> to vector<8xf32>
    %318 = vector.shape_cast %317 : vector<8xf32> to vector<8x1xf32>
    %319 = vector.broadcast %318 : vector<8x1xf32> to vector<8x8xf32>
    %320 = arith.subf %316, %319 : vector<8x8xf32>
    %321 = math.exp %320 : vector<8x8xf32>
    %cst_111 = arith.constant dense<0.000000e+00> : vector<8xf32>
    %322 = vector.multi_reduction <add>, %321, %cst_111 [1] : vector<8x8xf32> to vector<8xf32>
    %323 = vector.shape_cast %322 : vector<8xf32> to vector<8x1xf32>
    %324 = tpu.reciprocal %323 {approx = true} : vector<8x1xf32> -> vector<8x1xf32>
    %325 = vector.broadcast %324 : vector<8x1xf32> to vector<8x8xf32>
    %326 = arith.mulf %321, %325 : vector<8x8xf32>
    %327 = arith.truncf %326 : vector<8x8xf32> to vector<8x8xbf16>
    %cst_112 = arith.constant dense<0.000000e+00> : vector<8x8xf32>
    %328 = tpu.matmul %327, %313, %cst_112 {dimension_numbers = #tpu.dot_dimension_numbers<[1], [0], [0], [1], [0, 0, 1, 1], [], []>} : vector<8x8xbf16>, vector<8x8xbf16>, vector<8x8xf32> -> vector<8x8xf32>
    %329 = vector.extract_strided_slice %287 {offsets = [0, 16], sizes = [8, 8], strides = [1, 1]} : vector<16x64xf32> to vector<8x8xf32>
    %330 = arith.truncf %329 : vector<8x8xf32> to vector<8x8xbf16>
    %331 = vector.extract_strided_slice %287 {offsets = [0, 48], sizes = [8, 8], strides = [1, 1]} : vector<16x64xf32> to vector<8x8xf32>
    %332 = arith.truncf %331 : vector<8x8xf32> to vector<8x8xbf16>
    %333 = vector.extract_strided_slice %290 {offsets = [16, 0], sizes = [8, 8], strides = [1, 1]} : vector<32x16xf32> to vector<8x8xf32>
    %334 = arith.truncf %333 : vector<8x8xf32> to vector<8x8xbf16>
    %cst_113 = arith.constant dense<0.000000e+00> : vector<8x8xf32>
    %335 = tpu.matmul %330, %334, %cst_113 {dimension_numbers = #tpu.dot_dimension_numbers<[1], [0], [0], [1], [0, 0, 1, 1], [], []>} : vector<8x8xbf16>, vector<8x8xbf16>, vector<8x8xf32> -> vector<8x8xf32>
    %cst_114 = arith.constant dense<0xFF800000> : vector<8xf32>
    %336 = vector.multi_reduction <maximumf>, %335, %cst_114 [1] : vector<8x8xf32> to vector<8xf32>
    %337 = vector.shape_cast %336 : vector<8xf32> to vector<8x1xf32>
    %338 = vector.broadcast %337 : vector<8x1xf32> to vector<8x8xf32>
    %339 = arith.subf %335, %338 : vector<8x8xf32>
    %340 = math.exp %339 : vector<8x8xf32>
    %cst_115 = arith.constant dense<0.000000e+00> : vector<8xf32>
    %341 = vector.multi_reduction <add>, %340, %cst_115 [1] : vector<8x8xf32> to vector<8xf32>
    %342 = vector.shape_cast %341 : vector<8xf32> to vector<8x1xf32>
    %343 = tpu.reciprocal %342 {approx = true} : vector<8x1xf32> -> vector<8x1xf32>
    %344 = vector.broadcast %343 : vector<8x1xf32> to vector<8x8xf32>
    %345 = arith.mulf %340, %344 : vector<8x8xf32>
    %346 = arith.truncf %345 : vector<8x8xf32> to vector<8x8xbf16>
    %cst_116 = arith.constant dense<0.000000e+00> : vector<8x8xf32>
    %347 = tpu.matmul %346, %332, %cst_116 {dimension_numbers = #tpu.dot_dimension_numbers<[1], [0], [0], [1], [0, 0, 1, 1], [], []>} : vector<8x8xbf16>, vector<8x8xbf16>, vector<8x8xf32> -> vector<8x8xf32>
    %348 = vector.extract_strided_slice %287 {offsets = [0, 24], sizes = [8, 8], strides = [1, 1]} : vector<16x64xf32> to vector<8x8xf32>
    %349 = arith.truncf %348 : vector<8x8xf32> to vector<8x8xbf16>
    %350 = vector.extract_strided_slice %287 {offsets = [0, 56], sizes = [8, 8], strides = [1, 1]} : vector<16x64xf32> to vector<8x8xf32>
    %351 = arith.truncf %350 : vector<8x8xf32> to vector<8x8xbf16>
    %352 = vector.extract_strided_slice %290 {offsets = [24, 0], sizes = [8, 8], strides = [1, 1]} : vector<32x16xf32> to vector<8x8xf32>
    %353 = arith.truncf %352 : vector<8x8xf32> to vector<8x8xbf16>
    %cst_117 = arith.constant dense<0.000000e+00> : vector<8x8xf32>
    %354 = tpu.matmul %349, %353, %cst_117 {dimension_numbers = #tpu.dot_dimension_numbers<[1], [0], [0], [1], [0, 0, 1, 1], [], []>} : vector<8x8xbf16>, vector<8x8xbf16>, vector<8x8xf32> -> vector<8x8xf32>
    %cst_118 = arith.constant dense<0xFF800000> : vector<8xf32>
    %355 = vector.multi_reduction <maximumf>, %354, %cst_118 [1] : vector<8x8xf32> to vector<8xf32>
    %356 = vector.shape_cast %355 : vector<8xf32> to vector<8x1xf32>
    %357 = vector.broadcast %356 : vector<8x1xf32> to vector<8x8xf32>
    %358 = arith.subf %354, %357 : vector<8x8xf32>
    %359 = math.exp %358 : vector<8x8xf32>
    %cst_119 = arith.constant dense<0.000000e+00> : vector<8xf32>
    %360 = vector.multi_reduction <add>, %359, %cst_119 [1] : vector<8x8xf32> to vector<8xf32>
    %361 = vector.shape_cast %360 : vector<8xf32> to vector<8x1xf32>
    %362 = tpu.reciprocal %361 {approx = true} : vector<8x1xf32> -> vector<8x1xf32>
    %363 = vector.broadcast %362 : vector<8x1xf32> to vector<8x8xf32>
    %364 = arith.mulf %359, %363 : vector<8x8xf32>
    %365 = arith.truncf %364 : vector<8x8xf32> to vector<8x8xbf16>
    %cst_120 = arith.constant dense<0.000000e+00> : vector<8x8xf32>
    %366 = tpu.matmul %365, %351, %cst_120 {dimension_numbers = #tpu.dot_dimension_numbers<[1], [0], [0], [1], [0, 0, 1, 1], [], []>} : vector<8x8xbf16>, vector<8x8xbf16>, vector<8x8xf32> -> vector<8x8xf32>
    %367 = tpu.concatenate %309, %328, %347, %366 in 1 : vector<8x8xf32>, vector<8x8xf32>, vector<8x8xf32>, vector<8x8xf32> -> vector<8x32xf32>
    %368 = vector.extract_strided_slice %287 {offsets = [8, 0], sizes = [8, 8], strides = [1, 1]} : vector<16x64xf32> to vector<8x8xf32>
    %369 = arith.truncf %368 : vector<8x8xf32> to vector<8x8xbf16>
    %370 = vector.extract_strided_slice %287 {offsets = [8, 32], sizes = [8, 8], strides = [1, 1]} : vector<16x64xf32> to vector<8x8xf32>
    %371 = arith.truncf %370 : vector<8x8xf32> to vector<8x8xbf16>
    %372 = vector.extract_strided_slice %290 {offsets = [0, 8], sizes = [8, 8], strides = [1, 1]} : vector<32x16xf32> to vector<8x8xf32>
    %373 = arith.truncf %372 : vector<8x8xf32> to vector<8x8xbf16>
    %cst_121 = arith.constant dense<0.000000e+00> : vector<8x8xf32>
    %374 = tpu.matmul %369, %373, %cst_121 {dimension_numbers = #tpu.dot_dimension_numbers<[1], [0], [0], [1], [0, 0, 1, 1], [], []>} : vector<8x8xbf16>, vector<8x8xbf16>, vector<8x8xf32> -> vector<8x8xf32>
    %cst_122 = arith.constant dense<0xFF800000> : vector<8xf32>
    %375 = vector.multi_reduction <maximumf>, %374, %cst_122 [1] : vector<8x8xf32> to vector<8xf32>
    %376 = vector.shape_cast %375 : vector<8xf32> to vector<8x1xf32>
    %377 = vector.broadcast %376 : vector<8x1xf32> to vector<8x8xf32>
    %378 = arith.subf %374, %377 : vector<8x8xf32>
    %379 = math.exp %378 : vector<8x8xf32>
    %cst_123 = arith.constant dense<0.000000e+00> : vector<8xf32>
    %380 = vector.multi_reduction <add>, %379, %cst_123 [1] : vector<8x8xf32> to vector<8xf32>
    %381 = vector.shape_cast %380 : vector<8xf32> to vector<8x1xf32>
    %382 = tpu.reciprocal %381 {approx = true} : vector<8x1xf32> -> vector<8x1xf32>
    %383 = vector.broadcast %382 : vector<8x1xf32> to vector<8x8xf32>
    %384 = arith.mulf %379, %383 : vector<8x8xf32>
    %385 = arith.truncf %384 : vector<8x8xf32> to vector<8x8xbf16>
    %cst_124 = arith.constant dense<0.000000e+00> : vector<8x8xf32>
    %386 = tpu.matmul %385, %371, %cst_124 {dimension_numbers = #tpu.dot_dimension_numbers<[1], [0], [0], [1], [0, 0, 1, 1], [], []>} : vector<8x8xbf16>, vector<8x8xbf16>, vector<8x8xf32> -> vector<8x8xf32>
    %387 = vector.extract_strided_slice %287 {offsets = [8, 8], sizes = [8, 8], strides = [1, 1]} : vector<16x64xf32> to vector<8x8xf32>
    %388 = arith.truncf %387 : vector<8x8xf32> to vector<8x8xbf16>
    %389 = vector.extract_strided_slice %287 {offsets = [8, 40], sizes = [8, 8], strides = [1, 1]} : vector<16x64xf32> to vector<8x8xf32>
    %390 = arith.truncf %389 : vector<8x8xf32> to vector<8x8xbf16>
    %391 = vector.extract_strided_slice %290 {offsets = [8, 8], sizes = [8, 8], strides = [1, 1]} : vector<32x16xf32> to vector<8x8xf32>
    %392 = arith.truncf %391 : vector<8x8xf32> to vector<8x8xbf16>
    %cst_125 = arith.constant dense<0.000000e+00> : vector<8x8xf32>
    %393 = tpu.matmul %388, %392, %cst_125 {dimension_numbers = #tpu.dot_dimension_numbers<[1], [0], [0], [1], [0, 0, 1, 1], [], []>} : vector<8x8xbf16>, vector<8x8xbf16>, vector<8x8xf32> -> vector<8x8xf32>
    %cst_126 = arith.constant dense<0xFF800000> : vector<8xf32>
    %394 = vector.multi_reduction <maximumf>, %393, %cst_126 [1] : vector<8x8xf32> to vector<8xf32>
    %395 = vector.shape_cast %394 : vector<8xf32> to vector<8x1xf32>
    %396 = vector.broadcast %395 : vector<8x1xf32> to vector<8x8xf32>
    %397 = arith.subf %393, %396 : vector<8x8xf32>
    %398 = math.exp %397 : vector<8x8xf32>
    %cst_127 = arith.constant dense<0.000000e+00> : vector<8xf32>
    %399 = vector.multi_reduction <add>, %398, %cst_127 [1] : vector<8x8xf32> to vector<8xf32>
    %400 = vector.shape_cast %399 : vector<8xf32> to vector<8x1xf32>
    %401 = tpu.reciprocal %400 {approx = true} : vector<8x1xf32> -> vector<8x1xf32>
    %402 = vector.broadcast %401 : vector<8x1xf32> to vector<8x8xf32>
    %403 = arith.mulf %398, %402 : vector<8x8xf32>
    %404 = arith.truncf %403 : vector<8x8xf32> to vector<8x8xbf16>
    %cst_128 = arith.constant dense<0.000000e+00> : vector<8x8xf32>
    %405 = tpu.matmul %404, %390, %cst_128 {dimension_numbers = #tpu.dot_dimension_numbers<[1], [0], [0], [1], [0, 0, 1, 1], [], []>} : vector<8x8xbf16>, vector<8x8xbf16>, vector<8x8xf32> -> vector<8x8xf32>
    %406 = vector.extract_strided_slice %287 {offsets = [8, 16], sizes = [8, 8], strides = [1, 1]} : vector<16x64xf32> to vector<8x8xf32>
    %407 = arith.truncf %406 : vector<8x8xf32> to vector<8x8xbf16>
    %408 = vector.extract_strided_slice %287 {offsets = [8, 48], sizes = [8, 8], strides = [1, 1]} : vector<16x64xf32> to vector<8x8xf32>
    %409 = arith.truncf %408 : vector<8x8xf32> to vector<8x8xbf16>
    %410 = vector.extract_strided_slice %290 {offsets = [16, 8], sizes = [8, 8], strides = [1, 1]} : vector<32x16xf32> to vector<8x8xf32>
    %411 = arith.truncf %410 : vector<8x8xf32> to vector<8x8xbf16>
    %cst_129 = arith.constant dense<0.000000e+00> : vector<8x8xf32>
    %412 = tpu.matmul %407, %411, %cst_129 {dimension_numbers = #tpu.dot_dimension_numbers<[1], [0], [0], [1], [0, 0, 1, 1], [], []>} : vector<8x8xbf16>, vector<8x8xbf16>, vector<8x8xf32> -> vector<8x8xf32>
    %cst_130 = arith.constant dense<0xFF800000> : vector<8xf32>
    %413 = vector.multi_reduction <maximumf>, %412, %cst_130 [1] : vector<8x8xf32> to vector<8xf32>
    %414 = vector.shape_cast %413 : vector<8xf32> to vector<8x1xf32>
    %415 = vector.broadcast %414 : vector<8x1xf32> to vector<8x8xf32>
    %416 = arith.subf %412, %415 : vector<8x8xf32>
    %417 = math.exp %416 : vector<8x8xf32>
    %cst_131 = arith.constant dense<0.000000e+00> : vector<8xf32>
    %418 = vector.multi_reduction <add>, %417, %cst_131 [1] : vector<8x8xf32> to vector<8xf32>
    %419 = vector.shape_cast %418 : vector<8xf32> to vector<8x1xf32>
    %420 = tpu.reciprocal %419 {approx = true} : vector<8x1xf32> -> vector<8x1xf32>
    %421 = vector.broadcast %420 : vector<8x1xf32> to vector<8x8xf32>
    %422 = arith.mulf %417, %421 : vector<8x8xf32>
    %423 = arith.truncf %422 : vector<8x8xf32> to vector<8x8xbf16>
    %cst_132 = arith.constant dense<0.000000e+00> : vector<8x8xf32>
    %424 = tpu.matmul %423, %409, %cst_132 {dimension_numbers = #tpu.dot_dimension_numbers<[1], [0], [0], [1], [0, 0, 1, 1], [], []>} : vector<8x8xbf16>, vector<8x8xbf16>, vector<8x8xf32> -> vector<8x8xf32>
    %425 = vector.extract_strided_slice %287 {offsets = [8, 24], sizes = [8, 8], strides = [1, 1]} : vector<16x64xf32> to vector<8x8xf32>
    %426 = arith.truncf %425 : vector<8x8xf32> to vector<8x8xbf16>
    %427 = vector.extract_strided_slice %287 {offsets = [8, 56], sizes = [8, 8], strides = [1, 1]} : vector<16x64xf32> to vector<8x8xf32>
    %428 = arith.truncf %427 : vector<8x8xf32> to vector<8x8xbf16>
    %429 = vector.extract_strided_slice %290 {offsets = [24, 8], sizes = [8, 8], strides = [1, 1]} : vector<32x16xf32> to vector<8x8xf32>
    %430 = arith.truncf %429 : vector<8x8xf32> to vector<8x8xbf16>
    %cst_133 = arith.constant dense<0.000000e+00> : vector<8x8xf32>
    %431 = tpu.matmul %426, %430, %cst_133 {dimension_numbers = #tpu.dot_dimension_numbers<[1], [0], [0], [1], [0, 0, 1, 1], [], []>} : vector<8x8xbf16>, vector<8x8xbf16>, vector<8x8xf32> -> vector<8x8xf32>
    %cst_134 = arith.constant dense<0xFF800000> : vector<8xf32>
    %432 = vector.multi_reduction <maximumf>, %431, %cst_134 [1] : vector<8x8xf32> to vector<8xf32>
    %433 = vector.shape_cast %432 : vector<8xf32> to vector<8x1xf32>
    %434 = vector.broadcast %433 : vector<8x1xf32> to vector<8x8xf32>
    %435 = arith.subf %431, %434 : vector<8x8xf32>
    %436 = math.exp %435 : vector<8x8xf32>
    %cst_135 = arith.constant dense<0.000000e+00> : vector<8xf32>
    %437 = vector.multi_reduction <add>, %436, %cst_135 [1] : vector<8x8xf32> to vector<8xf32>
    %438 = vector.shape_cast %437 : vector<8xf32> to vector<8x1xf32>
    %439 = tpu.reciprocal %438 {approx = true} : vector<8x1xf32> -> vector<8x1xf32>
    %440 = vector.broadcast %439 : vector<8x1xf32> to vector<8x8xf32>
    %441 = arith.mulf %436, %440 : vector<8x8xf32>
    %442 = arith.truncf %441 : vector<8x8xf32> to vector<8x8xbf16>
    %cst_136 = arith.constant dense<0.000000e+00> : vector<8x8xf32>
    %443 = tpu.matmul %442, %428, %cst_136 {dimension_numbers = #tpu.dot_dimension_numbers<[1], [0], [0], [1], [0, 0, 1, 1], [], []>} : vector<8x8xbf16>, vector<8x8xbf16>, vector<8x8xf32> -> vector<8x8xf32>
    %444 = tpu.concatenate %386, %405, %424, %443 in 1 : vector<8x8xf32>, vector<8x8xf32>, vector<8x8xf32>, vector<8x8xf32> -> vector<8x32xf32>
    %445 = tpu.concatenate %367, %444 in 0 : vector<8x32xf32>, vector<8x32xf32> -> vector<16x32xf32>
    %446 = arith.truncf %445 : vector<16x32xf32> to vector<16x32xbf16>
    %c1_137 = arith.constant 1 : index
    %c0_138 = arith.constant 0 : index
    %c0_139 = arith.constant 0 : index
    %447 = vector.load %arg6[%c1_137, %c0_138, %c0_139] : memref<2x32x32xbf16, #tpu.memory_space<vmem>>, vector<1x32x32xbf16>
    %448 = vector.shape_cast %447 : vector<1x32x32xbf16> to vector<32x32xbf16>
    %cst_140 = arith.constant dense<0.000000e+00> : vector<16x32xf32>
    %449 = tpu.matmul %446, %448, %cst_140 {dimension_numbers = #tpu.dot_dimension_numbers<[1], [0], [0], [1], [0, 0, 1, 1], [], []>} : vector<16x32xbf16>, vector<32x32xbf16>, vector<16x32xf32> -> vector<16x32xf32>
    %c1_141 = arith.constant 1 : index
    %c0_142 = arith.constant 0 : index
    %c0_143 = arith.constant 0 : index
    %450 = vector.load %arg7[%c1_141, %c0_142, %c0_143] : memref<2x1x32xf32, #tpu.memory_space<vmem>>, vector<1x1x32xf32>
    %451 = vector.shape_cast %450 : vector<1x1x32xf32> to vector<1x32xf32>
    %452 = vector.broadcast %451 : vector<1x32xf32> to vector<16x32xf32>
    %453 = arith.addf %449, %452 : vector<16x32xf32>
    %454 = arith.addf %255, %453 : vector<16x32xf32>
    %c1_144 = arith.constant 1 : index
    %c0_145 = arith.constant 0 : index
    %c0_146 = arith.constant 0 : index
    %455 = vector.load %arg8[%c1_144, %c0_145, %c0_146] : memref<2x1x32xf32, #tpu.memory_space<vmem>>, vector<1x1x32xf32>
    %456 = vector.shape_cast %455 : vector<1x1x32xf32> to vector<1x32xf32>
    %c1_147 = arith.constant 1 : index
    %c0_148 = arith.constant 0 : index
    %c0_149 = arith.constant 0 : index
    %457 = vector.load %arg9[%c1_147, %c0_148, %c0_149] : memref<2x1x32xf32, #tpu.memory_space<vmem>>, vector<1x1x32xf32>
    %458 = vector.shape_cast %457 : vector<1x1x32xf32> to vector<1x32xf32>
    %cst_150 = arith.constant dense<0.000000e+00> : vector<16xf32>
    %459 = vector.multi_reduction <add>, %454, %cst_150 [1] : vector<16x32xf32> to vector<16xf32>
    %460 = vector.shape_cast %459 : vector<16xf32> to vector<16x1xf32>
    %cst_151 = arith.constant 3.200000e+01 : f32
    %461 = vector.broadcast %cst_151 : f32 to vector<16x1xf32>
    %462 = arith.divf %460, %461 : vector<16x1xf32>
    %463 = arith.mulf %454, %454 : vector<16x32xf32>
    %cst_152 = arith.constant dense<0.000000e+00> : vector<16xf32>
    %464 = vector.multi_reduction <add>, %463, %cst_152 [1] : vector<16x32xf32> to vector<16xf32>
    %465 = vector.shape_cast %464 : vector<16xf32> to vector<16x1xf32>
    %cst_153 = arith.constant 3.200000e+01 : f32
    %466 = vector.broadcast %cst_153 : f32 to vector<16x1xf32>
    %467 = arith.divf %465, %466 : vector<16x1xf32>
    %468 = arith.mulf %462, %462 : vector<16x1xf32>
    %469 = arith.subf %467, %468 : vector<16x1xf32>
    %470 = vector.broadcast %462 : vector<16x1xf32> to vector<16x32xf32>
    %471 = arith.subf %454, %470 : vector<16x32xf32>
    %cst_154 = arith.constant 9.99999974E-6 : f32
    %472 = vector.broadcast %cst_154 : f32 to vector<16x1xf32>
    %473 = arith.addf %469, %472 : vector<16x1xf32>
    %474 = math.rsqrt %473 : vector<16x1xf32>
    %475 = vector.broadcast %474 : vector<16x1xf32> to vector<16x32xf32>
    %476 = arith.mulf %471, %475 : vector<16x32xf32>
    %477 = vector.broadcast %456 : vector<1x32xf32> to vector<16x32xf32>
    %478 = arith.mulf %476, %477 : vector<16x32xf32>
    %479 = vector.broadcast %458 : vector<1x32xf32> to vector<16x32xf32>
    %480 = arith.addf %478, %479 : vector<16x32xf32>
    %481 = arith.truncf %480 : vector<16x32xf32> to vector<16x32xbf16>
    %c1_155 = arith.constant 1 : index
    %c0_156 = arith.constant 0 : index
    %c0_157 = arith.constant 0 : index
    %482 = vector.load %arg10[%c1_155, %c0_156, %c0_157] : memref<2x32x128xbf16, #tpu.memory_space<vmem>>, vector<1x32x128xbf16>
    %483 = vector.shape_cast %482 : vector<1x32x128xbf16> to vector<32x128xbf16>
    %cst_158 = arith.constant dense<0.000000e+00> : vector<16x128xf32>
    %484 = tpu.matmul %481, %483, %cst_158 {dimension_numbers = #tpu.dot_dimension_numbers<[1], [0], [0], [1], [0, 0, 1, 1], [], []>} : vector<16x32xbf16>, vector<32x128xbf16>, vector<16x128xf32> -> vector<16x128xf32>
    %c1_159 = arith.constant 1 : index
    %c0_160 = arith.constant 0 : index
    %c0_161 = arith.constant 0 : index
    %485 = vector.load %arg11[%c1_159, %c0_160, %c0_161] : memref<2x1x128xf32, #tpu.memory_space<vmem>>, vector<1x1x128xf32>
    %486 = vector.shape_cast %485 : vector<1x1x128xf32> to vector<1x128xf32>
    %487 = vector.broadcast %486 : vector<1x128xf32> to vector<16x128xf32>
    %488 = arith.addf %484, %487 : vector<16x128xf32>
    %cst_162 = arith.constant 5.000000e-01 : f32
    %489 = vector.broadcast %cst_162 : f32 to vector<16x128xf32>
    %490 = arith.mulf %489, %488 : vector<16x128xf32>
    %cst_163 = arith.constant 4.471500e-02 : f32
    %491 = vector.broadcast %cst_163 : f32 to vector<16x128xf32>
    %492 = arith.mulf %491, %488 : vector<16x128xf32>
    %493 = arith.mulf %492, %488 : vector<16x128xf32>
    %494 = arith.mulf %493, %488 : vector<16x128xf32>
    %495 = arith.addf %488, %494 : vector<16x128xf32>
    %cst_164 = arith.constant 0.797884583 : f32
    %496 = vector.broadcast %cst_164 : f32 to vector<16x128xf32>
    %497 = arith.mulf %496, %495 : vector<16x128xf32>
    %498 = math.tanh %497 : vector<16x128xf32>
    %cst_165 = arith.constant 1.000000e+00 : f32
    %499 = vector.broadcast %cst_165 : f32 to vector<16x128xf32>
    %500 = arith.addf %499, %498 : vector<16x128xf32>
    %501 = arith.mulf %490, %500 : vector<16x128xf32>
    %502 = arith.truncf %501 : vector<16x128xf32> to vector<16x128xbf16>
    %c1_166 = arith.constant 1 : index
    %c0_167 = arith.constant 0 : index
    %c0_168 = arith.constant 0 : index
    %503 = vector.load %arg12[%c1_166, %c0_167, %c0_168] : memref<2x128x32xbf16, #tpu.memory_space<vmem>>, vector<1x128x32xbf16>
    %504 = vector.shape_cast %503 : vector<1x128x32xbf16> to vector<128x32xbf16>
    %cst_169 = arith.constant dense<0.000000e+00> : vector<16x32xf32>
    %505 = tpu.matmul %502, %504, %cst_169 {dimension_numbers = #tpu.dot_dimension_numbers<[1], [0], [0], [1], [0, 0, 1, 1], [], []>} : vector<16x128xbf16>, vector<128x32xbf16>, vector<16x32xf32> -> vector<16x32xf32>
    %c1_170 = arith.constant 1 : index
    %c0_171 = arith.constant 0 : index
    %c0_172 = arith.constant 0 : index
    %506 = vector.load %arg13[%c1_170, %c0_171, %c0_172] : memref<2x1x32xf32, #tpu.memory_space<vmem>>, vector<1x1x32xf32>
    %507 = vector.shape_cast %506 : vector<1x1x32xf32> to vector<1x32xf32>
    %508 = vector.broadcast %507 : vector<1x32xf32> to vector<16x32xf32>
    %509 = arith.addf %505, %508 : vector<16x32xf32>
    %510 = arith.addf %454, %509 : vector<16x32xf32>
    %c0_173 = arith.constant 0 : index
    %c0_174 = arith.constant 0 : index
    %511 = vector.load %arg14[%c0_173, %c0_174] : memref<16x32xf32, #tpu.memory_space<vmem>>, vector<16x32xf32>
    tpu.vector_store %arg14[%c0_173, %c0_174], %510 {strides = array<i32>} : memref<16x32xf32, #tpu.memory_space<vmem>>, vector<16x32xf32>,
    return
  }
  func.func @transform_0(%arg0: i32) -> (i32, i32) {
    %c0_i32 = arith.constant 0 : i32
    %c0_i32_0 = arith.constant 0 : i32
    return %arg0, %c0_i32 : i32, i32
  }
  func.func @transform_1(%arg0: i32) -> (i32, i32, i32) {
    %c0_i32 = arith.constant 0 : i32
    %c0_i32_0 = arith.constant 0 : i32
    %c0_i32_1 = arith.constant 0 : i32
    %c0_i32_2 = arith.constant 0 : i32
    return %c0_i32, %c0_i32_0, %c0_i32_1 : i32, i32, i32
  }
  func.func @transform_2(%arg0: i32) -> (i32, i32, i32) {
    %c0_i32 = arith.constant 0 : i32
    %c0_i32_0 = arith.constant 0 : i32
    %c0_i32_1 = arith.constant 0 : i32
    %c0_i32_2 = arith.constant 0 : i32
    return %c0_i32, %c0_i32_0, %c0_i32_1 : i32, i32, i32
  }
  func.func @transform_3(%arg0: i32) -> (i32, i32, i32) {
    %c0_i32 = arith.constant 0 : i32
    %c0_i32_0 = arith.constant 0 : i32
    %c0_i32_1 = arith.constant 0 : i32
    %c0_i32_2 = arith.constant 0 : i32
    return %c0_i32, %c0_i32_0, %c0_i32_1 : i32, i32, i32
  }
  func.func @transform_4(%arg0: i32) -> (i32, i32, i32) {
    %c0_i32 = arith.constant 0 : i32
    %c0_i32_0 = arith.constant 0 : i32
    %c0_i32_1 = arith.constant 0 : i32
    %c0_i32_2 = arith.constant 0 : i32
    return %c0_i32, %c0_i32_0, %c0_i32_1 : i32, i32, i32
  }
  func.func @transform_5(%arg0: i32) -> (i32, i32, i32) {
    %c0_i32 = arith.constant 0 : i32
    %c0_i32_0 = arith.constant 0 : i32
    %c0_i32_1 = arith.constant 0 : i32
    %c0_i32_2 = arith.constant 0 : i32
    return %c0_i32, %c0_i32_0, %c0_i32_1 : i32, i32, i32
  }
  func.func @transform_6(%arg0: i32) -> (i32, i32, i32) {
    %c0_i32 = arith.constant 0 : i32
    %c0_i32_0 = arith.constant 0 : i32
    %c0_i32_1 = arith.constant 0 : i32
    %c0_i32_2 = arith.constant 0 : i32
    return %c0_i32, %c0_i32_0, %c0_i32_1 : i32, i32, i32
  }
  func.func @transform_7(%arg0: i32) -> (i32, i32, i32) {
    %c0_i32 = arith.constant 0 : i32
    %c0_i32_0 = arith.constant 0 : i32
    %c0_i32_1 = arith.constant 0 : i32
    %c0_i32_2 = arith.constant 0 : i32
    return %c0_i32, %c0_i32_0, %c0_i32_1 : i32, i32, i32
  }
  func.func @transform_8(%arg0: i32) -> (i32, i32, i32) {
    %c0_i32 = arith.constant 0 : i32
    %c0_i32_0 = arith.constant 0 : i32
    %c0_i32_1 = arith.constant 0 : i32
    %c0_i32_2 = arith.constant 0 : i32
    return %c0_i32, %c0_i32_0, %c0_i32_1 : i32, i32, i32
  }
  func.func @transform_9(%arg0: i32) -> (i32, i32, i32) {
    %c0_i32 = arith.constant 0 : i32
    %c0_i32_0 = arith.constant 0 : i32
    %c0_i32_1 = arith.constant 0 : i32
    %c0_i32_2 = arith.constant 0 : i32
    return %c0_i32, %c0_i32_0, %c0_i32_1 : i32, i32, i32
  }
  func.func @transform_10(%arg0: i32) -> (i32, i32, i32) {
    %c0_i32 = arith.constant 0 : i32
    %c0_i32_0 = arith.constant 0 : i32
    %c0_i32_1 = arith.constant 0 : i32
    %c0_i32_2 = arith.constant 0 : i32
    return %c0_i32, %c0_i32_0, %c0_i32_1 : i32, i32, i32
  }
  func.func @transform_11(%arg0: i32) -> (i32, i32, i32) {
    %c0_i32 = arith.constant 0 : i32
    %c0_i32_0 = arith.constant 0 : i32
    %c0_i32_1 = arith.constant 0 : i32
    %c0_i32_2 = arith.constant 0 : i32
    return %c0_i32, %c0_i32_0, %c0_i32_1 : i32, i32, i32
  }
  func.func @transform_12(%arg0: i32) -> (i32, i32, i32) {
    %c0_i32 = arith.constant 0 : i32
    %c0_i32_0 = arith.constant 0 : i32
    %c0_i32_1 = arith.constant 0 : i32
    %c0_i32_2 = arith.constant 0 : i32
    return %c0_i32, %c0_i32_0, %c0_i32_1 : i32, i32, i32
  }
  func.func @transform_13(%arg0: i32) -> (i32, i32) {
    %c0_i32 = arith.constant 0 : i32
    %c0_i32_0 = arith.constant 0 : i32
    return %arg0, %c0_i32 : i32, i32
  }
}

</mosaic_0001>

<llo_original>
// kernel: simple_decoder.1
$region0: #{simple_decoder.1}
  #allocation0 [shape = 'u32[]', space=smem, size = 0x4, offset = 0x4, fixed_abs, tag = 'smem constant byte address 0x4 - core index']
  #allocation1 [shape = 'u32[72,128]{1,0:T(1,128)}', space=vmem, size = 0x9000, scoped, tag = 'internal scratch']
  %s0 = inlined_call_operand.vmem [shape: f32[16,32], index: 0, kind: input, shape index: {}]
  %s1 = inlined_call_operand.vmem [shape: f32[2,1,32], index: 1, kind: input, shape index: {}]
  %s2 = inlined_call_operand.vmem [shape: f32[2,1,32], index: 2, kind: input, shape index: {}]
  %s3 = inlined_call_operand.vmem [shape: bf16[2,32,64], index: 3, kind: input, shape index: {}]
  %s4 = inlined_call_operand.vmem [shape: bf16[2,32,32], index: 4, kind: input, shape index: {}]
  %s5 = inlined_call_operand.vmem [shape: bf16[2,32,32], index: 5, kind: input, shape index: {}]
  %s6 = inlined_call_operand.vmem [shape: f32[2,1,32], index: 6, kind: input, shape index: {}]
  %s7 = inlined_call_operand.vmem [shape: f32[2,1,32], index: 7, kind: input, shape index: {}]
  %s8 = inlined_call_operand.vmem [shape: f32[2,1,32], index: 8, kind: input, shape index: {}]
  %s9 = inlined_call_operand.vmem [shape: bf16[2,32,128], index: 9, kind: input, shape index: {}]
  %s10 = inlined_call_operand.vmem [shape: f32[2,1,128], index: 10, kind: input, shape index: {}]
  %s11 = inlined_call_operand.vmem [shape: bf16[2,128,32], index: 11, kind: input, shape index: {}]
  %s12 = inlined_call_operand.vmem [shape: f32[2,1,32], index: 12, kind: input, shape index: {}]
  %s13 = inlined_call_operand.hbm [shape: f32[16,32], index: 13, kind: output, shape index: {}]
  %s14 = sld [smem:[#allocation0]]
  $region62: #{simple_decoder.1} parent=0
    _
  %s16 = ssub.s32 1, %s14
  %s17 = scalar_select 0, %s16, %s14
  $region1: #{simple_decoder.1} parent=0
    #allocation2 [shape = 'u8[8192]{0}', space=vmem, size = 0x2000, scoped, tag = 'output window, operand 0, single buffered']
    #allocation3 [shape = 's32[1]{0}', space=sflag, size = 0x4, scoped, tag = 'scoped memory for simple_decoder.1']
    %18 = vsyncpa [#allocation3], 0
    // Predicated region
    $region2: #{simple_decoder.1} parent=1 // pred_check
      _
    $region3: #{simple_decoder.1} parent=1 // pred_check_branch
      %20 = sbr.rel (0) target = $region5
    $region4: #{simple_decoder.1} parent=1 // pred_region
      _
    $region5: #{simple_decoder.1} parent=1 // pred_fallthru
      _
    // Predicated region
    $region6: #{simple_decoder.1} parent=1 // pred_check
      _
    $region7: #{simple_decoder.1} parent=1 // pred_check_branch
      %22 = sbr.rel (0) target = $region9
    $region8: #{simple_decoder.1} parent=1 // pred_region
      _
    $region9: #{simple_decoder.1} parent=1 // pred_fallthru
      _
    // Predicated region
    $region10: #{simple_decoder.1} parent=1 // pred_check
      _
    $region11: #{simple_decoder.1} parent=1 // pred_check_branch
      %24 = sbr.rel (0) target = $region13
    $region12: #{simple_decoder.1} parent=1 // pred_region
      _
    $region13: #{simple_decoder.1} parent=1 // pred_fallthru
      _
    // Predicated region
    $region14: #{simple_decoder.1} parent=1 // pred_check
      _
    $region15: #{simple_decoder.1} parent=1 // pred_check_branch
      %26 = sbr.rel (0) target = $region17
    $region16: #{simple_decoder.1} parent=1 // pred_region
      _
    $region17: #{simple_decoder.1} parent=1 // pred_fallthru
      _
    // Predicated region
    $region18: #{simple_decoder.1} parent=1 // pred_check
      _
    $region19: #{simple_decoder.1} parent=1 // pred_check_branch
      %28 = sbr.rel (0) target = $region21
    $region20: #{simple_decoder.1} parent=1 // pred_region
      _
    $region21: #{simple_decoder.1} parent=1 // pred_fallthru
      _
    // Predicated region
    $region22: #{simple_decoder.1} parent=1 // pred_check
      _
    $region23: #{simple_decoder.1} parent=1 // pred_check_branch
      %30 = sbr.rel (0) target = $region25
    $region24: #{simple_decoder.1} parent=1 // pred_region
      _
    $region25: #{simple_decoder.1} parent=1 // pred_fallthru
      _
    // Predicated region
    $region26: #{simple_decoder.1} parent=1 // pred_check
      _
    $region27: #{simple_decoder.1} parent=1 // pred_check_branch
      %32 = sbr.rel (0) target = $region29
    $region28: #{simple_decoder.1} parent=1 // pred_region
      _
    $region29: #{simple_decoder.1} parent=1 // pred_fallthru
      _
    // Predicated region
    $region30: #{simple_decoder.1} parent=1 // pred_check
      _
    $region31: #{simple_decoder.1} parent=1 // pred_check_branch
      %34 = sbr.rel (0) target = $region33
    $region32: #{simple_decoder.1} parent=1 // pred_region
      _
    $region33: #{simple_decoder.1} parent=1 // pred_fallthru
      _
    // Predicated region
    $region34: #{simple_decoder.1} parent=1 // pred_check
      _
    $region35: #{simple_decoder.1} parent=1 // pred_check_branch
      %36 = sbr.rel (0) target = $region37
    $region36: #{simple_decoder.1} parent=1 // pred_region
      _
    $region37: #{simple_decoder.1} parent=1 // pred_fallthru
      _
    // Predicated region
    $region38: #{simple_decoder.1} parent=1 // pred_check
      _
    $region39: #{simple_decoder.1} parent=1 // pred_check_branch
      %38 = sbr.rel (0) target = $region41
    $region40: #{simple_decoder.1} parent=1 // pred_region
      _
    $region41: #{simple_decoder.1} parent=1 // pred_fallthru
      _
    // Predicated region
    $region42: #{simple_decoder.1} parent=1 // pred_check
      _
    $region43: #{simple_decoder.1} parent=1 // pred_check_branch
      %40 = sbr.rel (0) target = $region45
    $region44: #{simple_decoder.1} parent=1 // pred_region
      _
    $region45: #{simple_decoder.1} parent=1 // pred_fallthru
      _
    // Predicated region
    $region46: #{simple_decoder.1} parent=1 // pred_check
      _
    $region47: #{simple_decoder.1} parent=1 // pred_check_branch
      %42 = sbr.rel (0) target = $region49
    $region48: #{simple_decoder.1} parent=1 // pred_region
      _
    $region49: #{simple_decoder.1} parent=1 // pred_fallthru
      _
    // Predicated region
    $region50: #{simple_decoder.1} parent=1 // pred_check
      _
    $region51: #{simple_decoder.1} parent=1 // pred_check_branch
      %44 = sbr.rel (0) target = $region53
    $region52: #{simple_decoder.1} parent=1 // pred_region
      _
    $region53: #{simple_decoder.1} parent=1 // pred_fallthru
      _
    %v46 = vld [vmem:[%s0] sm:$0xff]
    %v47 = vld [vmem:[%s0 + $0x8] sm:$0xff]
    %v48 = vld [vmem:[%s1] sm:$0x1]
    %v49 = vld [vmem:[%s2] sm:$0x1]
    %vm50 = vcmask 261120
    %v51 = vsel %vm50, %v46, 0.0
    %52 = vadd.xlane.f32.xlu0 %v51
    %v53 = vpop.xlane.xlu0 %52
    %v54 = vsel %vm50, %v47, 0.0
    %55 = vadd.xlane.f32.xlu0 %v54
    %v56 = vpop.xlane.xlu0 %55
    %v57 = vrcp.pop 32.0
    %v58 = vmul.f32 32.0, %v57
    %v59 = vsub.f32 1.0, %v58
    %v60 = vmul.f32 %v57, %v59
    %v61 = vadd.f32 %v57, %v60
    %vm62 = vweird.f32 %v57
    %v63 = vsel %vm62, %v57, %v61
    %v64 = vmul.f32 %v53, %v63
    %v65 = vmul.f32 %v56, %v63
    %v66 = vmul.f32 %v46, %v46
    %v67 = vmul.f32 %v47, %v47
    %v68 = vsel %vm50, %v66, 0.0
    %69 = vadd.xlane.f32.xlu0 %v68
    %v70 = vpop.xlane.xlu0 %69
    %v71 = vsel %vm50, %v67, 0.0
    %72 = vadd.xlane.f32.xlu0 %v71
    %v73 = vpop.xlane.xlu0 %72
    %v74 = vmul.f32 %v70, %v63
    %v75 = vmul.f32 %v73, %v63
    %v76 = vmul.f32 %v64, %v64
    %v77 = vmul.f32 %v65, %v65
    %v78 = vsub.f32 %v74, %v76
    %v79 = vsub.f32 %v75, %v77
    %v80 = vsub.f32 %v46, %v64
    %v81 = vsub.f32 %v47, %v65
    %v82 = vadd.f32 %v78, 1e-05
    %v83 = vadd.f32 %v79, 1e-05
    %v84 = vrsqrt.pop %v82
    %v85 = vmul.f32 %v84, %v82
    %v86 = vmul.f32 %v85, %v84
    %v87 = vmul.f32 0.5, %v86
    %v88 = vsub.f32 1.5, %v87
    %v89 = vmul.f32 %v84, %v88
    %vm90 = vweird.f32 %v82
    %vm91 = vweird.f32 %v84
    %vm92 = vmor %vm90, %vm91
    %v93 = vsel %vm92, %v84, %v89
    %v94 = vrsqrt.pop %v83
    %v95 = vmul.f32 %v94, %v83
    %v96 = vmul.f32 %v95, %v94
    %v97 = vmul.f32 0.5, %v96
    %v98 = vsub.f32 1.5, %v97
    %v99 = vmul.f32 %v94, %v98
    %vm100 = vweird.f32 %v83
    %vm101 = vweird.f32 %v94
    %vm102 = vmor %vm100, %vm101
    %v103 = vsel %vm102, %v94, %v99
    %v104 = vmul.f32 %v80, %v93
    %v105 = vmul.f32 %v81, %v103
    %v107 = vperm.slane %v48, 0
    %v109 = vmul.f32 %v104, %v107
    %v110 = vmul.f32 %v105, %v107
    %v112 = vperm.slane %v49, 0
    %v114 = vadd.f32 %v109, %v112
    %v115 = vadd.f32 %v110, %v112
    %v116 = vpack.c.bf16 %v115, %v114
    %117 = vxpose.xlu0.b32.start [1/16] %v114, 128
    %118 = vxpose.xlu0.b32.cont [2/16] %v115, 128
    %119 = vxpose.xlu0.b32.cont [3/16] 0.0, 128
    %120 = vxpose.xlu0.b32.cont [4/16] 0.0, 128
    %121 = vxpose.xlu0.b32.cont [5/16] 0.0, 128
    %122 = vxpose.xlu0.b32.cont [6/16] 0.0, 128
    %123 = vxpose.xlu0.b32.cont [7/16] 0.0, 128
    %124 = vxpose.xlu0.b32.cont [8/16] 0.0, 128
    %125 = vxpose.xlu0.b32.cont [9/16] 0.0, 128
    %126 = vxpose.xlu0.b32.cont [10/16] 0.0, 128
    %127 = vxpose.xlu0.b32.cont [11/16] 0.0, 128
    %128 = vxpose.xlu0.b32.cont [12/16] 0.0, 128
    %129 = vxpose.xlu0.b32.cont [13/16] 0.0, 128
    %130 = vxpose.xlu0.b32.cont [14/16] 0.0, 128
    %131 = vxpose.xlu0.b32.cont [15/16] 0.0, 128
    %132 = vxpose.xlu0.b32.end [16/16] 0.0, 128
    %v133 = vpop.trf.xlu0
    %v134 = vpop.trf.xlu0
    %v135 = vpop.trf.xlu0
    %v136 = vpop.trf.xlu0
    %v137 = vpop.trf.xlu0
    %v138 = vpop.trf.xlu0
    %v139 = vpop.trf.xlu0
    %v140 = vpop.trf.xlu0
    %v141 = vpop.trf.xlu0
    %v142 = vpop.trf.xlu0
    %v143 = vpop.trf.xlu0
    %v144 = vpop.trf.xlu0
    %v145 = vpop.trf.xlu0
    %v146 = vpop.trf.xlu0
    %v147 = vpop.trf.xlu0
    %v148 = vpop.trf.xlu0
    %v149 = vpack.c.bf16 %v134, %v133
    %v150 = vpack.c.bf16 %v136, %v135
    %v151 = vld [vmem:[%s3] sm:$0xf]
    %v152 = vld [vmem:[%s3 + $0x4] sm:$0xf]
    %v153 = vld [vmem:[%s3 + $0x8] sm:$0xf]
    %v154 = vld [vmem:[%s3 + $0xc] sm:$0xf]
    %v159 = vunpack.c.l.b16 %v151
    %v160 = vunpack.c.l.b16 %v152
    %v161 = vunpack.c.l.b16 %v153
    %v162 = vunpack.c.l.b16 %v154
    %v163 = vpack.c.b16 %v160, %v159
    %v164 = vpack.c.b16 %v162, %v161
    %v168 = vsel %vm50, %v116, 0
    %170 = vmatpush.bf16.msra.mxu0 0
    %171 = vmatpush.bf16.msra.mxu0 0
    %172 = vmatpush.bf16.msra.mxu0 0
    %173 = vmatpush.bf16.msra.mxu0 0
    %174 = vmatpush.bf16.msra.mxu0 0
    %175 = vmatpush.bf16.msra.mxu0 0
    %176 = vmatpush.bf16.msra.mxu0 %v164
    %177 = vmatpush.bf16.msra.mxu0 %v163
    %178 = vmatmul.bf16.gmra.mxu0 %v168
    %v179 = vpop.f32.mrf.mxu0
    %v180 = vadd.f32 0.0, %v179
    %v181 = vpop.f32.mrf.mxu0
    %v182 = vadd.f32 0.0, %v181
    %183 = vdwg.mxu0
    %v184 = vld [vmem:[%s4] sm:$0xf]
    %v185 = vld [vmem:[%s4 + $0x4] sm:$0xf]
    %v186 = vld [vmem:[%s4 + $0x8] sm:$0xf]
    %v187 = vld [vmem:[%s4 + $0xc] sm:$0xf]
    %v192 = vunpack.c.l.b16 %v184
    %v193 = vunpack.c.l.b16 %v185
    %v194 = vunpack.c.l.b16 %v186
    %v195 = vunpack.c.l.b16 %v187
    %v196 = vpack.c.b16 %v193, %v192
    %v197 = vpack.c.b16 %v195, %v194
    %v199 = vsel %vm50, %v196, 0
    %v202 = vsel %vm50, %v197, 0
    %204 = vmatpush.bf16.msra.mxu0 0
    %205 = vmatpush.bf16.msra.mxu0 0
    %206 = vmatpush.bf16.msra.mxu0 0
    %207 = vmatpush.bf16.msra.mxu0 0
    %208 = vmatpush.bf16.msra.mxu0 0
    %209 = vmatpush.bf16.msra.mxu0 0
    %210 = vmatpush.bf16.msra.mxu0 %v150
    %211 = vmatpush.bf16.msra.mxu0 %v149
    %212 = vmatmul.bf16.gmra.mxu0 %v199
    %v213 = vpop.f32.mrf.mxu0
    %v214 = vadd.f32 0.0, %v213
    %v215 = vpop.f32.mrf.mxu0
    %v216 = vadd.f32 0.0, %v215
    %217 = vmatmul.bf16.gmra.mxu0 %v202
    %v218 = vpop.f32.mrf.mxu0
    %v219 = vadd.f32 0.0, %v218
    %v220 = vpop.f32.mrf.mxu0
    %v221 = vadd.f32 0.0, %v220
    %222 = vdwg.mxu0
    %v223 = vpack.c.bf16 %v180, %v180
    %v224 = vpack.c.bf16 %v214, %v214
    %vm225 = vcmask 64512
    %v227 = vsel %vm225, %v223, 0
    %vm229 = vcmask 1043456
    %v231 = vsel %vm229, %v224, 0
    %233 = vmatpush.bf16.msra.mxu0 0
    %234 = vmatpush.bf16.msra.mxu0 0
    %235 = vmatpush.bf16.msra.mxu0 0
    %236 = vmatpush.bf16.msra.mxu0 0
    %237 = vmatpush.bf16.msra.mxu0 0
    %238 = vmatpush.bf16.msra.mxu0 0
    %239 = vmatpush.bf16.msra.mxu0 0
    %240 = vmatpush.bf16.msra.mxu0 %v231
    %241 = vmatmul.bf16.gmra.mxu0 %v227
    %v242 = vpop.f32.mrf.mxu0
    %v243 = vadd.f32 0.0, %v242
    %v244 = vpop.f32.mrf.mxu0
    %245 = vdwg.mxu0
    %v246 = vsel %vm225, %v243, -inf
    %247 = vmax.xlane.f32.xlu0 %v246
    %v248 = vpop.xlane.xlu0 %247
    %v249 = vsub.f32 %v243, %v248
    %v250 = vmul.f32 %v249, 1.442695
    %v251 = vpow.pop %v250
    %v252 = vsel %vm225, %v251, 0.0
    %253 = vadd.xlane.f32.xlu0 %v252
    %v254 = vpop.xlane.xlu0 %253
    %v255 = vrcp.pop %v254
    %v256 = vmul.f32 %v251, %v255
    %v257 = vpack.c.bf16 %v256, %v256
    %259 = vrot.lane.b32.xlu0 %v223, 96
    %v260 = vpop.permute.xlu0 %259
    %v262 = vsel %vm225, %v257, 0
    %v265 = vsel %vm229, %v260, 0
    %267 = vmatpush.bf16.msra.mxu0 0
    %268 = vmatpush.bf16.msra.mxu0 0
    %269 = vmatpush.bf16.msra.mxu0 0
    %270 = vmatpush.bf16.msra.mxu0 0
    %271 = vmatpush.bf16.msra.mxu0 0
    %272 = vmatpush.bf16.msra.mxu0 0
    %273 = vmatpush.bf16.msra.mxu0 0
    %274 = vmatpush.bf16.msra.mxu0 %v265
    %275 = vmatmul.bf16.gmra.mxu0 %v262
    %v276 = vpop.f32.mrf.mxu0
    %v277 = vadd.f32 0.0, %v276
    %v278 = vpop.f32.mrf.mxu0
    %279 = vdwg.mxu0
    %v280 = vpack.c.bf16 %v216, %v216
    %281 = vrot.lane.b32.xlu0 %v223, 120
    %v282 = vpop.permute.xlu0 %281
    %v284 = vsel %vm225, %v282, 0
    %v287 = vsel %vm229, %v280, 0
    %289 = vmatpush.bf16.msra.mxu0 0
    %290 = vmatpush.bf16.msra.mxu0 0
    %291 = vmatpush.bf16.msra.mxu0 0
    %292 = vmatpush.bf16.msra.mxu0 0
    %293 = vmatpush.bf16.msra.mxu0 0
    %294 = vmatpush.bf16.msra.mxu0 0
    %295 = vmatpush.bf16.msra.mxu0 0
    %296 = vmatpush.bf16.msra.mxu0 %v287
    %297 = vmatmul.bf16.gmra.mxu0 %v284
    %v298 = vpop.f32.mrf.mxu0
    %v299 = vadd.f32 0.0, %v298
    %v300 = vpop.f32.mrf.mxu0
    %301 = vdwg.mxu0
    %v302 = vsel %vm225, %v299, -inf
    %303 = vmax.xlane.f32.xlu0 %v302
    %v304 = vpop.xlane.xlu0 %303
    %v305 = vsub.f32 %v299, %v304
    %v306 = vmul.f32 %v305, 1.442695
    %v307 = vpow.pop %v306
    %v308 = vsel %vm225, %v307, 0.0
    %309 = vadd.xlane.f32.xlu0 %v308
    %v310 = vpop.xlane.xlu0 %309
    %v311 = vrcp.pop %v310
    %v312 = vmul.f32 %v307, %v311
    %v313 = vpack.c.bf16 %v312, %v312
    %314 = vrot.lane.b32.xlu0 %v223, 88
    %v315 = vpop.permute.xlu0 %314
    %v317 = vsel %vm225, %v313, 0
    %v320 = vsel %vm229, %v315, 0
    %322 = vmatpush.bf16.msra.mxu0 0
    %323 = vmatpush.bf16.msra.mxu0 0
    %324 = vmatpush.bf16.msra.mxu0 0
    %325 = vmatpush.bf16.msra.mxu0 0
    %326 = vmatpush.bf16.msra.mxu0 0
    %327 = vmatpush.bf16.msra.mxu0 0
    %328 = vmatpush.bf16.msra.mxu0 0
    %329 = vmatpush.bf16.msra.mxu0 %v320
    %330 = vmatmul.bf16.gmra.mxu0 %v317
    %v331 = vpop.f32.mrf.mxu0
    %v332 = vadd.f32 0.0, %v331
    %v333 = vpop.f32.mrf.mxu0
    %334 = vdwg.mxu0
    %v335 = vpack.c.bf16 %v219, %v219
    %336 = vrot.lane.b32.xlu0 %v223, 112
    %v337 = vpop.permute.xlu0 %336
    %v339 = vsel %vm225, %v337, 0
    %v342 = vsel %vm229, %v335, 0
    %344 = vmatpush.bf16.msra.mxu0 0
    %345 = vmatpush.bf16.msra.mxu0 0
    %346 = vmatpush.bf16.msra.mxu0 0
    %347 = vmatpush.bf16.msra.mxu0 0
    %348 = vmatpush.bf16.msra.mxu0 0
    %349 = vmatpush.bf16.msra.mxu0 0
    %350 = vmatpush.bf16.msra.mxu0 0
    %351 = vmatpush.bf16.msra.mxu0 %v342
    %352 = vmatmul.bf16.gmra.mxu0 %v339
    %v353 = vpop.f32.mrf.mxu0
    %v354 = vadd.f32 0.0, %v353
    %v355 = vpop.f32.mrf.mxu0
    %356 = vdwg.mxu0
    %v357 = vsel %vm225, %v354, -inf
    %358 = vmax.xlane.f32.xlu0 %v357
    %v359 = vpop.xlane.xlu0 %358
    %v360 = vsub.f32 %v354, %v359
    %v361 = vmul.f32 %v360, 1.442695
    %v362 = vpow.pop %v361
    %v363 = vsel %vm225, %v362, 0.0
    %364 = vadd.xlane.f32.xlu0 %v363
    %v365 = vpop.xlane.xlu0 %364
    %v366 = vrcp.pop %v365
    %v367 = vmul.f32 %v362, %v366
    %v368 = vpack.c.bf16 %v367, %v367
    %369 = vrot.lane.b32.xlu0 %v223, 80
    %v370 = vpop.permute.xlu0 %369
    %v372 = vsel %vm225, %v368, 0
    %v375 = vsel %vm229, %v370, 0
    %377 = vmatpush.bf16.msra.mxu0 0
    %378 = vmatpush.bf16.msra.mxu0 0
    %379 = vmatpush.bf16.msra.mxu0 0
    %380 = vmatpush.bf16.msra.mxu0 0
    %381 = vmatpush.bf16.msra.mxu0 0
    %382 = vmatpush.bf16.msra.mxu0 0
    %383 = vmatpush.bf16.msra.mxu0 0
    %384 = vmatpush.bf16.msra.mxu0 %v375
    %385 = vmatmul.bf16.gmra.mxu0 %v372
    %v386 = vpop.f32.mrf.mxu0
    %v387 = vadd.f32 0.0, %v386
    %v388 = vpop.f32.mrf.mxu0
    %389 = vdwg.mxu0
    %v390 = vpack.c.bf16 %v221, %v221
    %391 = vrot.lane.b32.xlu0 %v223, 104
    %v392 = vpop.permute.xlu0 %391
    %v394 = vsel %vm225, %v392, 0
    %v397 = vsel %vm229, %v390, 0
    %399 = vmatpush.bf16.msra.mxu0 0
    %400 = vmatpush.bf16.msra.mxu0 0
    %401 = vmatpush.bf16.msra.mxu0 0
    %402 = vmatpush.bf16.msra.mxu0 0
    %403 = vmatpush.bf16.msra.mxu0 0
    %404 = vmatpush.bf16.msra.mxu0 0
    %405 = vmatpush.bf16.msra.mxu0 0
    %406 = vmatpush.bf16.msra.mxu0 %v397
    %407 = vmatmul.bf16.gmra.mxu0 %v394
    %v408 = vpop.f32.mrf.mxu0
    %v409 = vadd.f32 0.0, %v408
    %v410 = vpop.f32.mrf.mxu0
    %411 = vdwg.mxu0
    %v412 = vsel %vm225, %v409, -inf
    %413 = vmax.xlane.f32.xlu0 %v412
    %v414 = vpop.xlane.xlu0 %413
    %v415 = vsub.f32 %v409, %v414
    %v416 = vmul.f32 %v415, 1.442695
    %v417 = vpow.pop %v416
    %v418 = vsel %vm225, %v417, 0.0
    %419 = vadd.xlane.f32.xlu0 %v418
    %v420 = vpop.xlane.xlu0 %419
    %v421 = vrcp.pop %v420
    %v422 = vmul.f32 %v417, %v421
    %v423 = vpack.c.bf16 %v422, %v422
    %424 = vrot.lane.b32.xlu0 %v223, 72
    %v425 = vpop.permute.xlu0 %424
    %v427 = vsel %vm225, %v423, 0
    %v430 = vsel %vm229, %v425, 0
    %432 = vmatpush.bf16.msra.mxu0 0
    %433 = vmatpush.bf16.msra.mxu0 0
    %434 = vmatpush.bf16.msra.mxu0 0
    %435 = vmatpush.bf16.msra.mxu0 0
    %436 = vmatpush.bf16.msra.mxu0 0
    %437 = vmatpush.bf16.msra.mxu0 0
    %438 = vmatpush.bf16.msra.mxu0 0
    %439 = vmatpush.bf16.msra.mxu0 %v430
    %440 = vmatmul.bf16.gmra.mxu0 %v427
    %v441 = vpop.f32.mrf.mxu0
    %v442 = vadd.f32 0.0, %v441
    %v443 = vpop.f32.mrf.mxu0
    %444 = vdwg.mxu0
    %446 = vrot.lane.b32.xlu0 %v332, 8
    %v447 = vpop.permute.xlu0 %446
    %450 = vrot.lane.b32.xlu0 %v387, 16
    %v451 = vpop.permute.xlu0 %450
    %454 = vrot.lane.b32.xlu0 %v442, 24
    %v455 = vpop.permute.xlu0 %454
    %v457 = vsel %vm225, %v277, %v447
    %vm458 = vcmask 130048
    %v459 = vsel %vm458, %v457, %v451
    %vm460 = vcmask 195584
    %v461 = vsel %vm460, %v459, %v455
    %v462 = vpack.c.bf16 %v182, %v182
    %464 = vrot.lane.b32.xlu0 %v224, 120
    %v465 = vpop.permute.xlu0 %464
    %v467 = vsel %vm225, %v462, 0
    %v470 = vsel %vm229, %v465, 0
    %472 = vmatpush.bf16.msra.mxu0 0
    %473 = vmatpush.bf16.msra.mxu0 0
    %474 = vmatpush.bf16.msra.mxu0 0
    %475 = vmatpush.bf16.msra.mxu0 0
    %476 = vmatpush.bf16.msra.mxu0 0
    %477 = vmatpush.bf16.msra.mxu0 0
    %478 = vmatpush.bf16.msra.mxu0 0
    %479 = vmatpush.bf16.msra.mxu0 %v470
    %480 = vmatmul.bf16.gmra.mxu0 %v467
    %v481 = vpop.f32.mrf.mxu0
    %v482 = vadd.f32 0.0, %v481
    %v483 = vpop.f32.mrf.mxu0
    %484 = vdwg.mxu0
    %v485 = vsel %vm225, %v482, -inf
    %486 = vmax.xlane.f32.xlu0 %v485
    %v487 = vpop.xlane.xlu0 %486
    %v488 = vsub.f32 %v482, %v487
    %v489 = vmul.f32 %v488, 1.442695
    %v490 = vpow.pop %v489
    %v491 = vsel %vm225, %v490, 0.0
    %492 = vadd.xlane.f32.xlu0 %v491
    %v493 = vpop.xlane.xlu0 %492
    %v494 = vrcp.pop %v493
    %v495 = vmul.f32 %v490, %v494
    %v496 = vpack.c.bf16 %v495, %v495
    %498 = vrot.lane.b32.xlu0 %v462, 96
    %v499 = vpop.permute.xlu0 %498
    %v501 = vsel %vm225, %v496, 0
    %v504 = vsel %vm229, %v499, 0
    %506 = vmatpush.bf16.msra.mxu0 0
    %507 = vmatpush.bf16.msra.mxu0 0
    %508 = vmatpush.bf16.msra.mxu0 0
    %509 = vmatpush.bf16.msra.mxu0 0
    %510 = vmatpush.bf16.msra.mxu0 0
    %511 = vmatpush.bf16.msra.mxu0 0
    %512 = vmatpush.bf16.msra.mxu0 0
    %513 = vmatpush.bf16.msra.mxu0 %v504
    %514 = vmatmul.bf16.gmra.mxu0 %v501
    %v515 = vpop.f32.mrf.mxu0
    %v516 = vadd.f32 0.0, %v515
    %v517 = vpop.f32.mrf.mxu0
    %518 = vdwg.mxu0
    %519 = vrot.lane.b32.xlu0 %v462, 120
    %v520 = vpop.permute.xlu0 %519
    %522 = vrot.lane.b32.xlu0 %v280, 120
    %v523 = vpop.permute.xlu0 %522
    %v525 = vsel %vm225, %v520, 0
    %v528 = vsel %vm229, %v523, 0
    %530 = vmatpush.bf16.msra.mxu0 0
    %531 = vmatpush.bf16.msra.mxu0 0
    %532 = vmatpush.bf16.msra.mxu0 0
    %533 = vmatpush.bf16.msra.mxu0 0
    %534 = vmatpush.bf16.msra.mxu0 0
    %535 = vmatpush.bf16.msra.mxu0 0
    %536 = vmatpush.bf16.msra.mxu0 0
    %537 = vmatpush.bf16.msra.mxu0 %v528
    %538 = vmatmul.bf16.gmra.mxu0 %v525
    %v539 = vpop.f32.mrf.mxu0
    %v540 = vadd.f32 0.0, %v539
    %v541 = vpop.f32.mrf.mxu0
    %542 = vdwg.mxu0
    %v543 = vsel %vm225, %v540, -inf
    %544 = vmax.xlane.f32.xlu0 %v543
    %v545 = vpop.xlane.xlu0 %544
    %v546 = vsub.f32 %v540, %v545
    %v547 = vmul.f32 %v546, 1.442695
    %v548 = vpow.pop %v547
    %v549 = vsel %vm225, %v548, 0.0
    %550 = vadd.xlane.f32.xlu0 %v549
    %v551 = vpop.xlane.xlu0 %550
    %v552 = vrcp.pop %v551
    %v553 = vmul.f32 %v548, %v552
    %v554 = vpack.c.bf16 %v553, %v553
    %555 = vrot.lane.b32.xlu0 %v462, 88
    %v556 = vpop.permute.xlu0 %555
    %v558 = vsel %vm225, %v554, 0
    %v561 = vsel %vm229, %v556, 0
    %563 = vmatpush.bf16.msra.mxu0 0
    %564 = vmatpush.bf16.msra.mxu0 0
    %565 = vmatpush.bf16.msra.mxu0 0
    %566 = vmatpush.bf16.msra.mxu0 0
    %567 = vmatpush.bf16.msra.mxu0 0
    %568 = vmatpush.bf16.msra.mxu0 0
    %569 = vmatpush.bf16.msra.mxu0 0
    %570 = vmatpush.bf16.msra.mxu0 %v561
    %571 = vmatmul.bf16.gmra.mxu0 %v558
    %v572 = vpop.f32.mrf.mxu0
    %v573 = vadd.f32 0.0, %v572
    %v574 = vpop.f32.mrf.mxu0
    %575 = vdwg.mxu0
    %576 = vrot.lane.b32.xlu0 %v462, 112
    %v577 = vpop.permute.xlu0 %576
    %579 = vrot.lane.b32.xlu0 %v335, 120
    %v580 = vpop.permute.xlu0 %579
    %v582 = vsel %vm225, %v577, 0
    %v585 = vsel %vm229, %v580, 0
    %587 = vmatpush.bf16.msra.mxu0 0
    %588 = vmatpush.bf16.msra.mxu0 0
    %589 = vmatpush.bf16.msra.mxu0 0
    %590 = vmatpush.bf16.msra.mxu0 0
    %591 = vmatpush.bf16.msra.mxu0 0
    %592 = vmatpush.bf16.msra.mxu0 0
    %593 = vmatpush.bf16.msra.mxu0 0
    %594 = vmatpush.bf16.msra.mxu0 %v585
    %595 = vmatmul.bf16.gmra.mxu0 %v582
    %v596 = vpop.f32.mrf.mxu0
    %v597 = vadd.f32 0.0, %v596
    %v598 = vpop.f32.mrf.mxu0
    %599 = vdwg.mxu0
    %v600 = vsel %vm225, %v597, -inf
    %601 = vmax.xlane.f32.xlu0 %v600
    %v602 = vpop.xlane.xlu0 %601
    %v603 = vsub.f32 %v597, %v602
    %v604 = vmul.f32 %v603, 1.442695
    %v605 = vpow.pop %v604
    %v606 = vsel %vm225, %v605, 0.0
    %607 = vadd.xlane.f32.xlu0 %v606
    %v608 = vpop.xlane.xlu0 %607
    %v609 = vrcp.pop %v608
    %v610 = vmul.f32 %v605, %v609
    %v611 = vpack.c.bf16 %v610, %v610
    %612 = vrot.lane.b32.xlu0 %v462, 80
    %v613 = vpop.permute.xlu0 %612
    %v615 = vsel %vm225, %v611, 0
    %v618 = vsel %vm229, %v613, 0
    %620 = vmatpush.bf16.msra.mxu0 0
    %621 = vmatpush.bf16.msra.mxu0 0
    %622 = vmatpush.bf16.msra.mxu0 0
    %623 = vmatpush.bf16.msra.mxu0 0
    %624 = vmatpush.bf16.msra.mxu0 0
    %625 = vmatpush.bf16.msra.mxu0 0
    %626 = vmatpush.bf16.msra.mxu0 0
    %627 = vmatpush.bf16.msra.mxu0 %v618
    %628 = vmatmul.bf16.gmra.mxu0 %v615
    %v629 = vpop.f32.mrf.mxu0
    %v630 = vadd.f32 0.0, %v629
    %v631 = vpop.f32.mrf.mxu0
    %632 = vdwg.mxu0
    %633 = vrot.lane.b32.xlu0 %v462, 104
    %v634 = vpop.permute.xlu0 %633
    %636 = vrot.lane.b32.xlu0 %v390, 120
    %v637 = vpop.permute.xlu0 %636
    %v639 = vsel %vm225, %v634, 0
    %v642 = vsel %vm229, %v637, 0
    %644 = vmatpush.bf16.msra.mxu0 0
    %645 = vmatpush.bf16.msra.mxu0 0
    %646 = vmatpush.bf16.msra.mxu0 0
    %647 = vmatpush.bf16.msra.mxu0 0
    %648 = vmatpush.bf16.msra.mxu0 0
    %649 = vmatpush.bf16.msra.mxu0 0
    %650 = vmatpush.bf16.msra.mxu0 0
    %651 = vmatpush.bf16.msra.mxu0 %v642
    %652 = vmatmul.bf16.gmra.mxu0 %v639
    %v653 = vpop.f32.mrf.mxu0
    %v654 = vadd.f32 0.0, %v653
    %v655 = vpop.f32.mrf.mxu0
    %656 = vdwg.mxu0
    %v657 = vsel %vm225, %v654, -inf
    %658 = vmax.xlane.f32.xlu0 %v657
    %v659 = vpop.xlane.xlu0 %658
    %v660 = vsub.f32 %v654, %v659
    %v661 = vmul.f32 %v660, 1.442695
    %v662 = vpow.pop %v661
    %v663 = vsel %vm225, %v662, 0.0
    %664 = vadd.xlane.f32.xlu0 %v663
    %v665 = vpop.xlane.xlu0 %664
    %v666 = vrcp.pop %v665
    %v667 = vmul.f32 %v662, %v666
    %v668 = vpack.c.bf16 %v667, %v667
    %669 = vrot.lane.b32.xlu0 %v462, 72
    %v670 = vpop.permute.xlu0 %669
    %v672 = vsel %vm225, %v668, 0
    %v675 = vsel %vm229, %v670, 0
    %677 = vmatpush.bf16.msra.mxu0 0
    %678 = vmatpush.bf16.msra.mxu0 0
    %679 = vmatpush.bf16.msra.mxu0 0
    %680 = vmatpush.bf16.msra.mxu0 0
    %681 = vmatpush.bf16.msra.mxu0 0
    %682 = vmatpush.bf16.msra.mxu0 0
    %683 = vmatpush.bf16.msra.mxu0 0
    %684 = vmatpush.bf16.msra.mxu0 %v675
    %685 = vmatmul.bf16.gmra.mxu0 %v672
    %v686 = vpop.f32.mrf.mxu0
    %v687 = vadd.f32 0.0, %v686
    %v688 = vpop.f32.mrf.mxu0
    %689 = vdwg.mxu0
    %691 = vrot.lane.b32.xlu0 %v573, 8
    %v692 = vpop.permute.xlu0 %691
    %695 = vrot.lane.b32.xlu0 %v630, 16
    %v696 = vpop.permute.xlu0 %695
    %699 = vrot.lane.b32.xlu0 %v687, 24
    %v700 = vpop.permute.xlu0 %699
    %v702 = vsel %vm225, %v516, %v692
    %v703 = vsel %vm458, %v702, %v696
    %v704 = vsel %vm460, %v703, %v700
    %v705 = vpack.c.bf16 %v704, %v461
    %v706 = vld [vmem:[%s5] sm:$0xf]
    %v707 = vld [vmem:[%s5 + $0x4] sm:$0xf]
    %v708 = vld [vmem:[%s5 + $0x8] sm:$0xf]
    %v709 = vld [vmem:[%s5 + $0xc] sm:$0xf]
    %v710 = vld [vmem:[%s6] sm:$0x1]
    %v712 = vperm.slane %v710, 0
    %v718 = vunpack.c.l.b16 %v706
    %v719 = vunpack.c.l.b16 %v707
    %v720 = vunpack.c.l.b16 %v708
    %v721 = vunpack.c.l.b16 %v709
    %v722 = vpack.c.b16 %v719, %v718
    %v723 = vpack.c.b16 %v721, %v720
    %v727 = vsel %vm50, %v705, 0
    %729 = vmatpush.bf16.msra.mxu0 0
    %730 = vmatpush.bf16.msra.mxu0 0
    %731 = vmatpush.bf16.msra.mxu0 0
    %732 = vmatpush.bf16.msra.mxu0 0
    %733 = vmatpush.bf16.msra.mxu0 0
    %734 = vmatpush.bf16.msra.mxu0 0
    %735 = vmatpush.bf16.msra.mxu0 %v723
    %736 = vmatpush.bf16.msra.mxu0 %v722
    %737 = vmatmul.bf16.gmra.mxu0 %v727
    %v738 = vpop.f32.mrf.mxu0
    %v739 = vadd.f32 %v712, %v738
    %v740 = vpop.f32.mrf.mxu0
    %v741 = vadd.f32 %v712, %v740
    %742 = vdwg.mxu0
    %v743 = vadd.f32 %v46, %v739
    %v744 = vadd.f32 %v47, %v741
    %v745 = vld [vmem:[%s7] sm:$0x1]
    %v746 = vld [vmem:[%s8] sm:$0x1]
    %v747 = vsel %vm50, %v743, 0.0
    %748 = vadd.xlane.f32.xlu0 %v747
    %v749 = vpop.xlane.xlu0 %748
    %v750 = vsel %vm50, %v744, 0.0
    %751 = vadd.xlane.f32.xlu0 %v750
    %v752 = vpop.xlane.xlu0 %751
    %v753 = vmul.f32 %v749, %v63
    %v754 = vmul.f32 %v752, %v63
    %v755 = vmul.f32 %v743, %v743
    %v756 = vmul.f32 %v744, %v744
    %v757 = vsel %vm50, %v755, 0.0
    %758 = vadd.xlane.f32.xlu0 %v757
    %v759 = vpop.xlane.xlu0 %758
    %v760 = vsel %vm50, %v756, 0.0
    %761 = vadd.xlane.f32.xlu0 %v760
    %v762 = vpop.xlane.xlu0 %761
    %v763 = vmul.f32 %v759, %v63
    %v764 = vmul.f32 %v762, %v63
    %v765 = vmul.f32 %v753, %v753
    %v766 = vmul.f32 %v754, %v754
    %v767 = vsub.f32 %v763, %v765
    %v768 = vsub.f32 %v764, %v766
    %v769 = vsub.f32 %v743, %v753
    %v770 = vsub.f32 %v744, %v754
    %v771 = vadd.f32 %v767, 1e-05
    %v772 = vadd.f32 %v768, 1e-05
    %v773 = vrsqrt.pop %v771
    %v774 = vmul.f32 %v773, %v771
    %v775 = vmul.f32 %v774, %v773
    %v776 = vmul.f32 0.5, %v775
    %v777 = vsub.f32 1.5, %v776
    %v778 = vmul.f32 %v773, %v777
    %vm779 = vweird.f32 %v771
    %vm780 = vweird.f32 %v773
    %vm781 = vmor %vm779, %vm780
    %v782 = vsel %vm781, %v773, %v778
    %v783 = vrsqrt.pop %v772
    %v784 = vmul.f32 %v783, %v772
    %v785 = vmul.f32 %v784, %v783
    %v786 = vmul.f32 0.5, %v785
    %v787 = vsub.f32 1.5, %v786
    %v788 = vmul.f32 %v783, %v787
    %vm789 = vweird.f32 %v772
    %vm790 = vweird.f32 %v783
    %vm791 = vmor %vm789, %vm790
    %v792 = vsel %vm791, %v783, %v788
    %v793 = vmul.f32 %v769, %v782
    %v794 = vmul.f32 %v770, %v792
    %v796 = vperm.slane %v745, 0
    %v798 = vmul.f32 %v793, %v796
    %v799 = vmul.f32 %v794, %v796
    %v801 = vperm.slane %v746, 0
    %v803 = vadd.f32 %v798, %v801
    %v804 = vadd.f32 %v799, %v801
    %v805 = vpack.c.bf16 %v804, %v803
    %v806 = vld [vmem:[%s9] sm:$0xf]
    %v807 = vld [vmem:[%s9 + $0x4] sm:$0xf]
    %v808 = vld [vmem:[%s9 + $0x8] sm:$0xf]
    %v809 = vld [vmem:[%s9 + $0xc] sm:$0xf]
    %v810 = vld [vmem:[%s10] sm:$0x1]
    %v812 = vperm.slane %v810, 0
    %v818 = vunpack.c.l.b16 %v806
    %v819 = vunpack.c.l.b16 %v807
    %v820 = vunpack.c.l.b16 %v808
    %v821 = vunpack.c.l.b16 %v809
    %v822 = vpack.c.b16 %v819, %v818
    %v823 = vpack.c.b16 %v821, %v820
    %v827 = vsel %vm50, %v805, 0
    %829 = vmatpush.bf16.msra.mxu0 0
    %830 = vmatpush.bf16.msra.mxu0 0
    %831 = vmatpush.bf16.msra.mxu0 0
    %832 = vmatpush.bf16.msra.mxu0 0
    %833 = vmatpush.bf16.msra.mxu0 0
    %834 = vmatpush.bf16.msra.mxu0 0
    %835 = vmatpush.bf16.msra.mxu0 %v823
    %836 = vmatpush.bf16.msra.mxu0 %v822
    %837 = vmatmul.bf16.gmra.mxu0 %v827
    %v838 = vpop.f32.mrf.mxu0
    %v839 = vadd.f32 %v812, %v838
    %v840 = vpop.f32.mrf.mxu0
    %v841 = vadd.f32 %v812, %v840
    %842 = vdwg.mxu0
    %v843 = vmul.f32 %v839, 0.5
    %v844 = vmul.f32 %v841, 0.5
    %v845 = vmul.f32 %v839, 0.044715
    %v846 = vmul.f32 %v841, 0.044715
    %v847 = vmul.f32 %v845, %v839
    %v848 = vmul.f32 %v846, %v841
    %v849 = vmul.f32 %v847, %v839
    %v850 = vmul.f32 %v848, %v841
    %v851 = vadd.f32 %v839, %v849
    %v852 = vadd.f32 %v841, %v850
    %v853 = vmul.f32 %v851, 0.7978846
    %v854 = vmul.f32 %v852, 0.7978846
    %v855 = vtanh.pop %v853
    %v856 = vtanh.pop %v854
    %v857 = vadd.f32 %v855, 1.0
    %v858 = vadd.f32 %v856, 1.0
    %v859 = vmul.f32 %v843, %v857
    %v860 = vmul.f32 %v844, %v858
    %v861 = vpack.c.bf16 %v860, %v859
    %v862 = vld [vmem:[%s11] sm:$0xf]
    %v863 = vld [vmem:[%s11 + $0x4] sm:$0xf]
    %v864 = vld [vmem:[%s11 + $0x8] sm:$0xf]
    %v865 = vld [vmem:[%s11 + $0xc] sm:$0xf]
    %v866 = vld [vmem:[%s11 + $0x10] sm:$0xf]
    %v867 = vld [vmem:[%s11 + $0x14] sm:$0xf]
    %v868 = vld [vmem:[%s11 + $0x18] sm:$0xf]
    %v869 = vld [vmem:[%s11 + $0x1c] sm:$0xf]
    %v870 = vld [vmem:[%s11 + $0x20] sm:$0xf]
    %v871 = vld [vmem:[%s11 + $0x24] sm:$0xf]
    %v872 = vld [vmem:[%s11 + $0x28] sm:$0xf]
    %v873 = vld [vmem:[%s11 + $0x2c] sm:$0xf]
    %v874 = vld [vmem:[%s11 + $0x30] sm:$0xf]
    %v875 = vld [vmem:[%s11 + $0x34] sm:$0xf]
    %v876 = vld [vmem:[%s11 + $0x38] sm:$0xf]
    %v877 = vld [vmem:[%s11 + $0x3c] sm:$0xf]
    %v878 = vld [vmem:[%s12] sm:$0x1]
    %v880 = vperm.slane %v878, 0
    %v898 = vunpack.c.l.b16 %v862
    %v899 = vunpack.c.l.b16 %v863
    %v900 = vunpack.c.l.b16 %v864
    %v901 = vunpack.c.l.b16 %v865
    %v902 = vunpack.c.l.b16 %v866
    %v903 = vunpack.c.l.b16 %v867
    %v904 = vunpack.c.l.b16 %v868
    %v905 = vunpack.c.l.b16 %v869
    %v906 = vunpack.c.l.b16 %v870
    %v907 = vunpack.c.l.b16 %v871
    %v908 = vunpack.c.l.b16 %v872
    %v909 = vunpack.c.l.b16 %v873
    %v910 = vunpack.c.l.b16 %v874
    %v911 = vunpack.c.l.b16 %v875
    %v912 = vunpack.c.l.b16 %v876
    %v913 = vunpack.c.l.b16 %v877
    %v914 = vpack.c.b16 %v899, %v898
    %v915 = vpack.c.b16 %v901, %v900
    %v916 = vpack.c.b16 %v903, %v902
    %v917 = vpack.c.b16 %v905, %v904
    %v918 = vpack.c.b16 %v907, %v906
    %v919 = vpack.c.b16 %v909, %v908
    %v920 = vpack.c.b16 %v911, %v910
    %v921 = vpack.c.b16 %v913, %v912
    %930 = vmatpush.bf16.msra.mxu0 %v921
    %931 = vmatpush.bf16.msra.mxu0 %v920
    %932 = vmatpush.bf16.msra.mxu0 %v919
    %933 = vmatpush.bf16.msra.mxu0 %v918
    %934 = vmatpush.bf16.msra.mxu0 %v917
    %935 = vmatpush.bf16.msra.mxu0 %v916
    %936 = vmatpush.bf16.msra.mxu0 %v915
    %937 = vmatpush.bf16.msra.mxu0 %v914
    %938 = vmatmul.bf16.gmra.mxu0 %v861
    %v939 = vpop.f32.mrf.mxu0
    %v940 = vadd.f32 %v880, %v939
    %v941 = vpop.f32.mrf.mxu0
    %v942 = vadd.f32 %v880, %v941
    %943 = vdwg.mxu0
    %v944 = vadd.f32 %v743, %v940
    %v945 = vadd.f32 %v744, %v942
    %s946 = scalar_lea.vmem %s1, 1
    %v947 = vld [vmem:[%s946] sm:$0x1]
    %s948 = scalar_lea.vmem %s2, 1
    %v949 = vld [vmem:[%s948] sm:$0x1]
    %v950 = vsel %vm50, %v944, 0.0
    %951 = vadd.xlane.f32.xlu0 %v950
    %v952 = vpop.xlane.xlu0 %951
    %v953 = vsel %vm50, %v945, 0.0
    %954 = vadd.xlane.f32.xlu0 %v953
    %v955 = vpop.xlane.xlu0 %954
    %v956 = vmul.f32 %v952, %v63
    %v957 = vmul.f32 %v955, %v63
    %v958 = vmul.f32 %v944, %v944
    %v959 = vmul.f32 %v945, %v945
    %v960 = vsel %vm50, %v958, 0.0
    %961 = vadd.xlane.f32.xlu0 %v960
    %v962 = vpop.xlane.xlu0 %961
    %v963 = vsel %vm50, %v959, 0.0
    %964 = vadd.xlane.f32.xlu0 %v963
    %v965 = vpop.xlane.xlu0 %964
    %v966 = vmul.f32 %v962, %v63
    %v967 = vmul.f32 %v965, %v63
    %v968 = vmul.f32 %v956, %v956
    %v969 = vmul.f32 %v957, %v957
    %v970 = vsub.f32 %v966, %v968
    %v971 = vsub.f32 %v967, %v969
    %v972 = vsub.f32 %v944, %v956
    %v973 = vsub.f32 %v945, %v957
    %v974 = vadd.f32 %v970, 1e-05
    %v975 = vadd.f32 %v971, 1e-05
    %v976 = vrsqrt.pop %v974
    %v977 = vmul.f32 %v976, %v974
    %v978 = vmul.f32 %v977, %v976
    %v979 = vmul.f32 0.5, %v978
    %v980 = vsub.f32 1.5, %v979
    %v981 = vmul.f32 %v976, %v980
    %vm982 = vweird.f32 %v974
    %vm983 = vweird.f32 %v976
    %vm984 = vmor %vm982, %vm983
    %v985 = vsel %vm984, %v976, %v981
    %v986 = vrsqrt.pop %v975
    %v987 = vmul.f32 %v986, %v975
    %v988 = vmul.f32 %v987, %v986
    %v989 = vmul.f32 0.5, %v988
    %v990 = vsub.f32 1.5, %v989
    %v991 = vmul.f32 %v986, %v990
    %vm992 = vweird.f32 %v975
    %vm993 = vweird.f32 %v986
    %vm994 = vmor %vm992, %vm993
    %v995 = vsel %vm994, %v986, %v991
    %v996 = vmul.f32 %v972, %v985
    %v997 = vmul.f32 %v973, %v995
    %v999 = vperm.slane %v947, 0
    %v1001 = vmul.f32 %v996, %v999
    %v1002 = vmul.f32 %v997, %v999
    %v1004 = vperm.slane %v949, 0
    %v1006 = vadd.f32 %v1001, %v1004
    %v1007 = vadd.f32 %v1002, %v1004
    %v1008 = vpack.c.bf16 %v1007, %v1006
    %1009 = vxpose.xlu0.b32.start [1/16] %v1006, 128
    %1010 = vxpose.xlu0.b32.cont [2/16] %v1007, 128
    %1011 = vxpose.xlu0.b32.cont [3/16] 0.0, 128
    %1012 = vxpose.xlu0.b32.cont [4/16] 0.0, 128
    %1013 = vxpose.xlu0.b32.cont [5/16] 0.0, 128
    %1014 = vxpose.xlu0.b32.cont [6/16] 0.0, 128
    %1015 = vxpose.xlu0.b32.cont [7/16] 0.0, 128
    %1016 = vxpose.xlu0.b32.cont [8/16] 0.0, 128
    %1017 = vxpose.xlu0.b32.cont [9/16] 0.0, 128
    %1018 = vxpose.xlu0.b32.cont [10/16] 0.0, 128
    %1019 = vxpose.xlu0.b32.cont [11/16] 0.0, 128
    %1020 = vxpose.xlu0.b32.cont [12/16] 0.0, 128
    %1021 = vxpose.xlu0.b32.cont [13/16] 0.0, 128
    %1022 = vxpose.xlu0.b32.cont [14/16] 0.0, 128
    %1023 = vxpose.xlu0.b32.cont [15/16] 0.0, 128
    %1024 = vxpose.xlu0.b32.end [16/16] 0.0, 128
    %v1025 = vpop.trf.xlu0
    %v1026 = vpop.trf.xlu0
    %v1027 = vpop.trf.xlu0
    %v1028 = vpop.trf.xlu0
    %v1029 = vpop.trf.xlu0
    %v1030 = vpop.trf.xlu0
    %v1031 = vpop.trf.xlu0
    %v1032 = vpop.trf.xlu0
    %v1033 = vpop.trf.xlu0
    %v1034 = vpop.trf.xlu0
    %v1035 = vpop.trf.xlu0
    %v1036 = vpop.trf.xlu0
    %v1037 = vpop.trf.xlu0
    %v1038 = vpop.trf.xlu0
    %v1039 = vpop.trf.xlu0
    %v1040 = vpop.trf.xlu0
    %v1041 = vpack.c.bf16 %v1026, %v1025
    %v1042 = vpack.c.bf16 %v1028, %v1027
    %s1043 = scalar_lea.vmem %s3, 16
    %v1044 = vld [vmem:[%s1043] sm:$0xf]
    %v1045 = vld [vmem:[%s1043 + $0x4] sm:$0xf]
    %v1046 = vld [vmem:[%s1043 + $0x8] sm:$0xf]
    %v1047 = vld [vmem:[%s1043 + $0xc] sm:$0xf]
    %v1052 = vunpack.c.l.b16 %v1044
    %v1053 = vunpack.c.l.b16 %v1045
    %v1054 = vunpack.c.l.b16 %v1046
    %v1055 = vunpack.c.l.b16 %v1047
    %v1056 = vpack.c.b16 %v1053, %v1052
    %v1057 = vpack.c.b16 %v1055, %v1054
    %v1061 = vsel %vm50, %v1008, 0
    %1063 = vmatpush.bf16.msra.mxu0 0
    %1064 = vmatpush.bf16.msra.mxu0 0
    %1065 = vmatpush.bf16.msra.mxu0 0
    %1066 = vmatpush.bf16.msra.mxu0 0
    %1067 = vmatpush.bf16.msra.mxu0 0
    %1068 = vmatpush.bf16.msra.mxu0 0
    %1069 = vmatpush.bf16.msra.mxu0 %v1057
    %1070 = vmatpush.bf16.msra.mxu0 %v1056
    %1071 = vmatmul.bf16.gmra.mxu0 %v1061
    %v1072 = vpop.f32.mrf.mxu0
    %v1073 = vadd.f32 0.0, %v1072
    %v1074 = vpop.f32.mrf.mxu0
    %v1075 = vadd.f32 0.0, %v1074
    %1076 = vdwg.mxu0
    %s1077 = scalar_lea.vmem %s4, 16
    %v1078 = vld [vmem:[%s1077] sm:$0xf]
    %v1079 = vld [vmem:[%s1077 + $0x4] sm:$0xf]
    %v1080 = vld [vmem:[%s1077 + $0x8] sm:$0xf]
    %v1081 = vld [vmem:[%s1077 + $0xc] sm:$0xf]
    %v1086 = vunpack.c.l.b16 %v1078
    %v1087 = vunpack.c.l.b16 %v1079
    %v1088 = vunpack.c.l.b16 %v1080
    %v1089 = vunpack.c.l.b16 %v1081
    %v1090 = vpack.c.b16 %v1087, %v1086
    %v1091 = vpack.c.b16 %v1089, %v1088
    %v1093 = vsel %vm50, %v1090, 0
    %v1096 = vsel %vm50, %v1091, 0
    %1098 = vmatpush.bf16.msra.mxu0 0
    %1099 = vmatpush.bf16.msra.mxu0 0
    %1100 = vmatpush.bf16.msra.mxu0 0
    %1101 = vmatpush.bf16.msra.mxu0 0
    %1102 = vmatpush.bf16.msra.mxu0 0
    %1103 = vmatpush.bf16.msra.mxu0 0
    %1104 = vmatpush.bf16.msra.mxu0 %v1042
    %1105 = vmatpush.bf16.msra.mxu0 %v1041
    %1106 = vmatmul.bf16.gmra.mxu0 %v1093
    %v1107 = vpop.f32.mrf.mxu0
    %v1108 = vadd.f32 0.0, %v1107
    %v1109 = vpop.f32.mrf.mxu0
    %v1110 = vadd.f32 0.0, %v1109
    %1111 = vmatmul.bf16.gmra.mxu0 %v1096
    %v1112 = vpop.f32.mrf.mxu0
    %v1113 = vadd.f32 0.0, %v1112
    %v1114 = vpop.f32.mrf.mxu0
    %v1115 = vadd.f32 0.0, %v1114
    %1116 = vdwg.mxu0
    %v1117 = vpack.c.bf16 %v1073, %v1073
    %v1118 = vpack.c.bf16 %v1108, %v1108
    %v1120 = vsel %vm225, %v1117, 0
    %v1123 = vsel %vm229, %v1118, 0
    %1125 = vmatpush.bf16.msra.mxu0 0
    %1126 = vmatpush.bf16.msra.mxu0 0
    %1127 = vmatpush.bf16.msra.mxu0 0
    %1128 = vmatpush.bf16.msra.mxu0 0
    %1129 = vmatpush.bf16.msra.mxu0 0
    %1130 = vmatpush.bf16.msra.mxu0 0
    %1131 = vmatpush.bf16.msra.mxu0 0
    %1132 = vmatpush.bf16.msra.mxu0 %v1123
    %1133 = vmatmul.bf16.gmra.mxu0 %v1120
    %v1134 = vpop.f32.mrf.mxu0
    %v1135 = vadd.f32 0.0, %v1134
    %v1136 = vpop.f32.mrf.mxu0
    %1137 = vdwg.mxu0
    %v1138 = vsel %vm225, %v1135, -inf
    %1139 = vmax.xlane.f32.xlu0 %v1138
    %v1140 = vpop.xlane.xlu0 %1139
    %v1141 = vsub.f32 %v1135, %v1140
    %v1142 = vmul.f32 %v1141, 1.442695
    %v1143 = vpow.pop %v1142
    %v1144 = vsel %vm225, %v1143, 0.0
    %1145 = vadd.xlane.f32.xlu0 %v1144
    %v1146 = vpop.xlane.xlu0 %1145
    %v1147 = vrcp.pop %v1146
    %v1148 = vmul.f32 %v1143, %v1147
    %v1149 = vpack.c.bf16 %v1148, %v1148
    %1151 = vrot.lane.b32.xlu0 %v1117, 96
    %v1152 = vpop.permute.xlu0 %1151
    %v1154 = vsel %vm225, %v1149, 0
    %v1157 = vsel %vm229, %v1152, 0
    %1159 = vmatpush.bf16.msra.mxu0 0
    %1160 = vmatpush.bf16.msra.mxu0 0
    %1161 = vmatpush.bf16.msra.mxu0 0
    %1162 = vmatpush.bf16.msra.mxu0 0
    %1163 = vmatpush.bf16.msra.mxu0 0
    %1164 = vmatpush.bf16.msra.mxu0 0
    %1165 = vmatpush.bf16.msra.mxu0 0
    %1166 = vmatpush.bf16.msra.mxu0 %v1157
    %1167 = vmatmul.bf16.gmra.mxu0 %v1154
    %v1168 = vpop.f32.mrf.mxu0
    %v1169 = vadd.f32 0.0, %v1168
    %v1170 = vpop.f32.mrf.mxu0
    %1171 = vdwg.mxu0
    %v1172 = vpack.c.bf16 %v1110, %v1110
    %1173 = vrot.lane.b32.xlu0 %v1117, 120
    %v1174 = vpop.permute.xlu0 %1173
    %v1176 = vsel %vm225, %v1174, 0
    %v1179 = vsel %vm229, %v1172, 0
    %1181 = vmatpush.bf16.msra.mxu0 0
    %1182 = vmatpush.bf16.msra.mxu0 0
    %1183 = vmatpush.bf16.msra.mxu0 0
    %1184 = vmatpush.bf16.msra.mxu0 0
    %1185 = vmatpush.bf16.msra.mxu0 0
    %1186 = vmatpush.bf16.msra.mxu0 0
    %1187 = vmatpush.bf16.msra.mxu0 0
    %1188 = vmatpush.bf16.msra.mxu0 %v1179
    %1189 = vmatmul.bf16.gmra.mxu0 %v1176
    %v1190 = vpop.f32.mrf.mxu0
    %v1191 = vadd.f32 0.0, %v1190
    %v1192 = vpop.f32.mrf.mxu0
    %1193 = vdwg.mxu0
    %v1194 = vsel %vm225, %v1191, -inf
    %1195 = vmax.xlane.f32.xlu0 %v1194
    %v1196 = vpop.xlane.xlu0 %1195
    %v1197 = vsub.f32 %v1191, %v1196
    %v1198 = vmul.f32 %v1197, 1.442695
    %v1199 = vpow.pop %v1198
    %v1200 = vsel %vm225, %v1199, 0.0
    %1201 = vadd.xlane.f32.xlu0 %v1200
    %v1202 = vpop.xlane.xlu0 %1201
    %v1203 = vrcp.pop %v1202
    %v1204 = vmul.f32 %v1199, %v1203
    %v1205 = vpack.c.bf16 %v1204, %v1204
    %1206 = vrot.lane.b32.xlu0 %v1117, 88
    %v1207 = vpop.permute.xlu0 %1206
    %v1209 = vsel %vm225, %v1205, 0
    %v1212 = vsel %vm229, %v1207, 0
    %1214 = vmatpush.bf16.msra.mxu0 0
    %1215 = vmatpush.bf16.msra.mxu0 0
    %1216 = vmatpush.bf16.msra.mxu0 0
    %1217 = vmatpush.bf16.msra.mxu0 0
    %1218 = vmatpush.bf16.msra.mxu0 0
    %1219 = vmatpush.bf16.msra.mxu0 0
    %1220 = vmatpush.bf16.msra.mxu0 0
    %1221 = vmatpush.bf16.msra.mxu0 %v1212
    %1222 = vmatmul.bf16.gmra.mxu0 %v1209
    %v1223 = vpop.f32.mrf.mxu0
    %v1224 = vadd.f32 0.0, %v1223
    %v1225 = vpop.f32.mrf.mxu0
    %1226 = vdwg.mxu0
    %v1227 = vpack.c.bf16 %v1113, %v1113
    %1228 = vrot.lane.b32.xlu0 %v1117, 112
    %v1229 = vpop.permute.xlu0 %1228
    %v1231 = vsel %vm225, %v1229, 0
    %v1234 = vsel %vm229, %v1227, 0
    %1236 = vmatpush.bf16.msra.mxu0 0
    %1237 = vmatpush.bf16.msra.mxu0 0
    %1238 = vmatpush.bf16.msra.mxu0 0
    %1239 = vmatpush.bf16.msra.mxu0 0
    %1240 = vmatpush.bf16.msra.mxu0 0
    %1241 = vmatpush.bf16.msra.mxu0 0
    %1242 = vmatpush.bf16.msra.mxu0 0
    %1243 = vmatpush.bf16.msra.mxu0 %v1234
    %1244 = vmatmul.bf16.gmra.mxu0 %v1231
    %v1245 = vpop.f32.mrf.mxu0
    %v1246 = vadd.f32 0.0, %v1245
    %v1247 = vpop.f32.mrf.mxu0
    %1248 = vdwg.mxu0
    %v1249 = vsel %vm225, %v1246, -inf
    %1250 = vmax.xlane.f32.xlu0 %v1249
    %v1251 = vpop.xlane.xlu0 %1250
    %v1252 = vsub.f32 %v1246, %v1251
    %v1253 = vmul.f32 %v1252, 1.442695
    %v1254 = vpow.pop %v1253
    %v1255 = vsel %vm225, %v1254, 0.0
    %1256 = vadd.xlane.f32.xlu0 %v1255
    %v1257 = vpop.xlane.xlu0 %1256
    %v1258 = vrcp.pop %v1257
    %v1259 = vmul.f32 %v1254, %v1258
    %v1260 = vpack.c.bf16 %v1259, %v1259
    %1261 = vrot.lane.b32.xlu0 %v1117, 80
    %v1262 = vpop.permute.xlu0 %1261
    %v1264 = vsel %vm225, %v1260, 0
    %v1267 = vsel %vm229, %v1262, 0
    %1269 = vmatpush.bf16.msra.mxu0 0
    %1270 = vmatpush.bf16.msra.mxu0 0
    %1271 = vmatpush.bf16.msra.mxu0 0
    %1272 = vmatpush.bf16.msra.mxu0 0
    %1273 = vmatpush.bf16.msra.mxu0 0
    %1274 = vmatpush.bf16.msra.mxu0 0
    %1275 = vmatpush.bf16.msra.mxu0 0
    %1276 = vmatpush.bf16.msra.mxu0 %v1267
    %1277 = vmatmul.bf16.gmra.mxu0 %v1264
    %v1278 = vpop.f32.mrf.mxu0
    %v1279 = vadd.f32 0.0, %v1278
    %v1280 = vpop.f32.mrf.mxu0
    %1281 = vdwg.mxu0
    %v1282 = vpack.c.bf16 %v1115, %v1115
    %1283 = vrot.lane.b32.xlu0 %v1117, 104
    %v1284 = vpop.permute.xlu0 %1283
    %v1286 = vsel %vm225, %v1284, 0
    %v1289 = vsel %vm229, %v1282, 0
    %1291 = vmatpush.bf16.msra.mxu0 0
    %1292 = vmatpush.bf16.msra.mxu0 0
    %1293 = vmatpush.bf16.msra.mxu0 0
    %1294 = vmatpush.bf16.msra.mxu0 0
    %1295 = vmatpush.bf16.msra.mxu0 0
    %1296 = vmatpush.bf16.msra.mxu0 0
    %1297 = vmatpush.bf16.msra.mxu0 0
    %1298 = vmatpush.bf16.msra.mxu0 %v1289
    %1299 = vmatmul.bf16.gmra.mxu0 %v1286
    %v1300 = vpop.f32.mrf.mxu0
    %v1301 = vadd.f32 0.0, %v1300
    %v1302 = vpop.f32.mrf.mxu0
    %1303 = vdwg.mxu0
    %v1304 = vsel %vm225, %v1301, -inf
    %1305 = vmax.xlane.f32.xlu0 %v1304
    %v1306 = vpop.xlane.xlu0 %1305
    %v1307 = vsub.f32 %v1301, %v1306
    %v1308 = vmul.f32 %v1307, 1.442695
    %v1309 = vpow.pop %v1308
    %v1310 = vsel %vm225, %v1309, 0.0
    %1311 = vadd.xlane.f32.xlu0 %v1310
    %v1312 = vpop.xlane.xlu0 %1311
    %v1313 = vrcp.pop %v1312
    %v1314 = vmul.f32 %v1309, %v1313
    %v1315 = vpack.c.bf16 %v1314, %v1314
    %1316 = vrot.lane.b32.xlu0 %v1117, 72
    %v1317 = vpop.permute.xlu0 %1316
    %v1319 = vsel %vm225, %v1315, 0
    %v1322 = vsel %vm229, %v1317, 0
    %1324 = vmatpush.bf16.msra.mxu0 0
    %1325 = vmatpush.bf16.msra.mxu0 0
    %1326 = vmatpush.bf16.msra.mxu0 0
    %1327 = vmatpush.bf16.msra.mxu0 0
    %1328 = vmatpush.bf16.msra.mxu0 0
    %1329 = vmatpush.bf16.msra.mxu0 0
    %1330 = vmatpush.bf16.msra.mxu0 0
    %1331 = vmatpush.bf16.msra.mxu0 %v1322
    %1332 = vmatmul.bf16.gmra.mxu0 %v1319
    %v1333 = vpop.f32.mrf.mxu0
    %v1334 = vadd.f32 0.0, %v1333
    %v1335 = vpop.f32.mrf.mxu0
    %1336 = vdwg.mxu0
    %1338 = vrot.lane.b32.xlu0 %v1224, 8
    %v1339 = vpop.permute.xlu0 %1338
    %1342 = vrot.lane.b32.xlu0 %v1279, 16
    %v1343 = vpop.permute.xlu0 %1342
    %1346 = vrot.lane.b32.xlu0 %v1334, 24
    %v1347 = vpop.permute.xlu0 %1346
    %v1349 = vsel %vm225, %v1169, %v1339
    %v1350 = vsel %vm458, %v1349, %v1343
    %v1351 = vsel %vm460, %v1350, %v1347
    %v1352 = vpack.c.bf16 %v1075, %v1075
    %1354 = vrot.lane.b32.xlu0 %v1118, 120
    %v1355 = vpop.permute.xlu0 %1354
    %v1357 = vsel %vm225, %v1352, 0
    %v1360 = vsel %vm229, %v1355, 0
    %1362 = vmatpush.bf16.msra.mxu0 0
    %1363 = vmatpush.bf16.msra.mxu0 0
    %1364 = vmatpush.bf16.msra.mxu0 0
    %1365 = vmatpush.bf16.msra.mxu0 0
    %1366 = vmatpush.bf16.msra.mxu0 0
    %1367 = vmatpush.bf16.msra.mxu0 0
    %1368 = vmatpush.bf16.msra.mxu0 0
    %1369 = vmatpush.bf16.msra.mxu0 %v1360
    %1370 = vmatmul.bf16.gmra.mxu0 %v1357
    %v1371 = vpop.f32.mrf.mxu0
    %v1372 = vadd.f32 0.0, %v1371
    %v1373 = vpop.f32.mrf.mxu0
    %1374 = vdwg.mxu0
    %v1375 = vsel %vm225, %v1372, -inf
    %1376 = vmax.xlane.f32.xlu0 %v1375
    %v1377 = vpop.xlane.xlu0 %1376
    %v1378 = vsub.f32 %v1372, %v1377
    %v1379 = vmul.f32 %v1378, 1.442695
    %v1380 = vpow.pop %v1379
    %v1381 = vsel %vm225, %v1380, 0.0
    %1382 = vadd.xlane.f32.xlu0 %v1381
    %v1383 = vpop.xlane.xlu0 %1382
    %v1384 = vrcp.pop %v1383
    %v1385 = vmul.f32 %v1380, %v1384
    %v1386 = vpack.c.bf16 %v1385, %v1385
    %1388 = vrot.lane.b32.xlu0 %v1352, 96
    %v1389 = vpop.permute.xlu0 %1388
    %v1391 = vsel %vm225, %v1386, 0
    %v1394 = vsel %vm229, %v1389, 0
    %1396 = vmatpush.bf16.msra.mxu0 0
    %1397 = vmatpush.bf16.msra.mxu0 0
    %1398 = vmatpush.bf16.msra.mxu0 0
    %1399 = vmatpush.bf16.msra.mxu0 0
    %1400 = vmatpush.bf16.msra.mxu0 0
    %1401 = vmatpush.bf16.msra.mxu0 0
    %1402 = vmatpush.bf16.msra.mxu0 0
    %1403 = vmatpush.bf16.msra.mxu0 %v1394
    %1404 = vmatmul.bf16.gmra.mxu0 %v1391
    %v1405 = vpop.f32.mrf.mxu0
    %v1406 = vadd.f32 0.0, %v1405
    %v1407 = vpop.f32.mrf.mxu0
    %1408 = vdwg.mxu0
    %1409 = vrot.lane.b32.xlu0 %v1352, 120
    %v1410 = vpop.permute.xlu0 %1409
    %1412 = vrot.lane.b32.xlu0 %v1172, 120
    %v1413 = vpop.permute.xlu0 %1412
    %v1415 = vsel %vm225, %v1410, 0
    %v1418 = vsel %vm229, %v1413, 0
    %1420 = vmatpush.bf16.msra.mxu0 0
    %1421 = vmatpush.bf16.msra.mxu0 0
    %1422 = vmatpush.bf16.msra.mxu0 0
    %1423 = vmatpush.bf16.msra.mxu0 0
    %1424 = vmatpush.bf16.msra.mxu0 0
    %1425 = vmatpush.bf16.msra.mxu0 0
    %1426 = vmatpush.bf16.msra.mxu0 0
    %1427 = vmatpush.bf16.msra.mxu0 %v1418
    %1428 = vmatmul.bf16.gmra.mxu0 %v1415
    %v1429 = vpop.f32.mrf.mxu0
    %v1430 = vadd.f32 0.0, %v1429
    %v1431 = vpop.f32.mrf.mxu0
    %1432 = vdwg.mxu0
    %v1433 = vsel %vm225, %v1430, -inf
    %1434 = vmax.xlane.f32.xlu0 %v1433
    %v1435 = vpop.xlane.xlu0 %1434
    %v1436 = vsub.f32 %v1430, %v1435
    %v1437 = vmul.f32 %v1436, 1.442695
    %v1438 = vpow.pop %v1437
    %v1439 = vsel %vm225, %v1438, 0.0
    %1440 = vadd.xlane.f32.xlu0 %v1439
    %v1441 = vpop.xlane.xlu0 %1440
    %v1442 = vrcp.pop %v1441
    %v1443 = vmul.f32 %v1438, %v1442
    %v1444 = vpack.c.bf16 %v1443, %v1443
    %1445 = vrot.lane.b32.xlu0 %v1352, 88
    %v1446 = vpop.permute.xlu0 %1445
    %v1448 = vsel %vm225, %v1444, 0
    %v1451 = vsel %vm229, %v1446, 0
    %1453 = vmatpush.bf16.msra.mxu0 0
    %1454 = vmatpush.bf16.msra.mxu0 0
    %1455 = vmatpush.bf16.msra.mxu0 0
    %1456 = vmatpush.bf16.msra.mxu0 0
    %1457 = vmatpush.bf16.msra.mxu0 0
    %1458 = vmatpush.bf16.msra.mxu0 0
    %1459 = vmatpush.bf16.msra.mxu0 0
    %1460 = vmatpush.bf16.msra.mxu0 %v1451
    %1461 = vmatmul.bf16.gmra.mxu0 %v1448
    %v1462 = vpop.f32.mrf.mxu0
    %v1463 = vadd.f32 0.0, %v1462
    %v1464 = vpop.f32.mrf.mxu0
    %1465 = vdwg.mxu0
    %1466 = vrot.lane.b32.xlu0 %v1352, 112
    %v1467 = vpop.permute.xlu0 %1466
    %1469 = vrot.lane.b32.xlu0 %v1227, 120
    %v1470 = vpop.permute.xlu0 %1469
    %v1472 = vsel %vm225, %v1467, 0
    %v1475 = vsel %vm229, %v1470, 0
    %1477 = vmatpush.bf16.msra.mxu0 0
    %1478 = vmatpush.bf16.msra.mxu0 0
    %1479 = vmatpush.bf16.msra.mxu0 0
    %1480 = vmatpush.bf16.msra.mxu0 0
    %1481 = vmatpush.bf16.msra.mxu0 0
    %1482 = vmatpush.bf16.msra.mxu0 0
    %1483 = vmatpush.bf16.msra.mxu0 0
    %1484 = vmatpush.bf16.msra.mxu0 %v1475
    %1485 = vmatmul.bf16.gmra.mxu0 %v1472
    %v1486 = vpop.f32.mrf.mxu0
    %v1487 = vadd.f32 0.0, %v1486
    %v1488 = vpop.f32.mrf.mxu0
    %1489 = vdwg.mxu0
    %v1490 = vsel %vm225, %v1487, -inf
    %1491 = vmax.xlane.f32.xlu0 %v1490
    %v1492 = vpop.xlane.xlu0 %1491
    %v1493 = vsub.f32 %v1487, %v1492
    %v1494 = vmul.f32 %v1493, 1.442695
    %v1495 = vpow.pop %v1494
    %v1496 = vsel %vm225, %v1495, 0.0
    %1497 = vadd.xlane.f32.xlu0 %v1496
    %v1498 = vpop.xlane.xlu0 %1497
    %v1499 = vrcp.pop %v1498
    %v1500 = vmul.f32 %v1495, %v1499
    %v1501 = vpack.c.bf16 %v1500, %v1500
    %1502 = vrot.lane.b32.xlu0 %v1352, 80
    %v1503 = vpop.permute.xlu0 %1502
    %v1505 = vsel %vm225, %v1501, 0
    %v1508 = vsel %vm229, %v1503, 0
    %1510 = vmatpush.bf16.msra.mxu0 0
    %1511 = vmatpush.bf16.msra.mxu0 0
    %1512 = vmatpush.bf16.msra.mxu0 0
    %1513 = vmatpush.bf16.msra.mxu0 0
    %1514 = vmatpush.bf16.msra.mxu0 0
    %1515 = vmatpush.bf16.msra.mxu0 0
    %1516 = vmatpush.bf16.msra.mxu0 0
    %1517 = vmatpush.bf16.msra.mxu0 %v1508
    %1518 = vmatmul.bf16.gmra.mxu0 %v1505
    %v1519 = vpop.f32.mrf.mxu0
    %v1520 = vadd.f32 0.0, %v1519
    %v1521 = vpop.f32.mrf.mxu0
    %1522 = vdwg.mxu0
    %1523 = vrot.lane.b32.xlu0 %v1352, 104
    %v1524 = vpop.permute.xlu0 %1523
    %1526 = vrot.lane.b32.xlu0 %v1282, 120
    %v1527 = vpop.permute.xlu0 %1526
    %v1529 = vsel %vm225, %v1524, 0
    %v1532 = vsel %vm229, %v1527, 0
    %1534 = vmatpush.bf16.msra.mxu0 0
    %1535 = vmatpush.bf16.msra.mxu0 0
    %1536 = vmatpush.bf16.msra.mxu0 0
    %1537 = vmatpush.bf16.msra.mxu0 0
    %1538 = vmatpush.bf16.msra.mxu0 0
    %1539 = vmatpush.bf16.msra.mxu0 0
    %1540 = vmatpush.bf16.msra.mxu0 0
    %1541 = vmatpush.bf16.msra.mxu0 %v1532
    %1542 = vmatmul.bf16.gmra.mxu0 %v1529
    %v1543 = vpop.f32.mrf.mxu0
    %v1544 = vadd.f32 0.0, %v1543
    %v1545 = vpop.f32.mrf.mxu0
    %1546 = vdwg.mxu0
    %v1547 = vsel %vm225, %v1544, -inf
    %1548 = vmax.xlane.f32.xlu0 %v1547
    %v1549 = vpop.xlane.xlu0 %1548
    %v1550 = vsub.f32 %v1544, %v1549
    %v1551 = vmul.f32 %v1550, 1.442695
    %v1552 = vpow.pop %v1551
    %v1553 = vsel %vm225, %v1552, 0.0
    %1554 = vadd.xlane.f32.xlu0 %v1553
    %v1555 = vpop.xlane.xlu0 %1554
    %v1556 = vrcp.pop %v1555
    %v1557 = vmul.f32 %v1552, %v1556
    %v1558 = vpack.c.bf16 %v1557, %v1557
    %1559 = vrot.lane.b32.xlu0 %v1352, 72
    %v1560 = vpop.permute.xlu0 %1559
    %v1562 = vsel %vm225, %v1558, 0
    %v1565 = vsel %vm229, %v1560, 0
    %1567 = vmatpush.bf16.msra.mxu0 0
    %1568 = vmatpush.bf16.msra.mxu0 0
    %1569 = vmatpush.bf16.msra.mxu0 0
    %1570 = vmatpush.bf16.msra.mxu0 0
    %1571 = vmatpush.bf16.msra.mxu0 0
    %1572 = vmatpush.bf16.msra.mxu0 0
    %1573 = vmatpush.bf16.msra.mxu0 0
    %1574 = vmatpush.bf16.msra.mxu0 %v1565
    %1575 = vmatmul.bf16.gmra.mxu0 %v1562
    %v1576 = vpop.f32.mrf.mxu0
    %v1577 = vadd.f32 0.0, %v1576
    %v1578 = vpop.f32.mrf.mxu0
    %1579 = vdwg.mxu0
    %1581 = vrot.lane.b32.xlu0 %v1463, 8
    %v1582 = vpop.permute.xlu0 %1581
    %1585 = vrot.lane.b32.xlu0 %v1520, 16
    %v1586 = vpop.permute.xlu0 %1585
    %1589 = vrot.lane.b32.xlu0 %v1577, 24
    %v1590 = vpop.permute.xlu0 %1589
    %v1592 = vsel %vm225, %v1406, %v1582
    %v1593 = vsel %vm458, %v1592, %v1586
    %v1594 = vsel %vm460, %v1593, %v1590
    %v1595 = vpack.c.bf16 %v1594, %v1351
    %s1596 = scalar_lea.vmem %s5, 16
    %v1597 = vld [vmem:[%s1596] sm:$0xf]
    %v1598 = vld [vmem:[%s1596 + $0x4] sm:$0xf]
    %v1599 = vld [vmem:[%s1596 + $0x8] sm:$0xf]
    %v1600 = vld [vmem:[%s1596 + $0xc] sm:$0xf]
    %s1601 = scalar_lea.vmem %s6, 1
    %v1602 = vld [vmem:[%s1601] sm:$0x1]
    %v1604 = vperm.slane %v1602, 0
    %v1610 = vunpack.c.l.b16 %v1597
    %v1611 = vunpack.c.l.b16 %v1598
    %v1612 = vunpack.c.l.b16 %v1599
    %v1613 = vunpack.c.l.b16 %v1600
    %v1614 = vpack.c.b16 %v1611, %v1610
    %v1615 = vpack.c.b16 %v1613, %v1612
    %v1619 = vsel %vm50, %v1595, 0
    %1621 = vmatpush.bf16.msra.mxu0 0
    %1622 = vmatpush.bf16.msra.mxu0 0
    %1623 = vmatpush.bf16.msra.mxu0 0
    %1624 = vmatpush.bf16.msra.mxu0 0
    %1625 = vmatpush.bf16.msra.mxu0 0
    %1626 = vmatpush.bf16.msra.mxu0 0
    %1627 = vmatpush.bf16.msra.mxu0 %v1615
    %1628 = vmatpush.bf16.msra.mxu0 %v1614
    %1629 = vmatmul.bf16.gmra.mxu0 %v1619
    %v1630 = vpop.f32.mrf.mxu0
    %v1631 = vadd.f32 %v1604, %v1630
    %v1632 = vpop.f32.mrf.mxu0
    %v1633 = vadd.f32 %v1604, %v1632
    %1634 = vdwg.mxu0
    %v1635 = vadd.f32 %v944, %v1631
    %v1636 = vadd.f32 %v945, %v1633
    %s1637 = scalar_lea.vmem %s7, 1
    %v1638 = vld [vmem:[%s1637] sm:$0x1]
    %s1639 = scalar_lea.vmem %s8, 1
    %v1640 = vld [vmem:[%s1639] sm:$0x1]
    %v1641 = vsel %vm50, %v1635, 0.0
    %1642 = vadd.xlane.f32.xlu0 %v1641
    %v1643 = vpop.xlane.xlu0 %1642
    %v1644 = vsel %vm50, %v1636, 0.0
    %1645 = vadd.xlane.f32.xlu0 %v1644
    %v1646 = vpop.xlane.xlu0 %1645
    %v1647 = vmul.f32 %v1643, %v63
    %v1648 = vmul.f32 %v1646, %v63
    %v1649 = vmul.f32 %v1635, %v1635
    %v1650 = vmul.f32 %v1636, %v1636
    %v1651 = vsel %vm50, %v1649, 0.0
    %1652 = vadd.xlane.f32.xlu0 %v1651
    %v1653 = vpop.xlane.xlu0 %1652
    %v1654 = vsel %vm50, %v1650, 0.0
    %1655 = vadd.xlane.f32.xlu0 %v1654
    %v1656 = vpop.xlane.xlu0 %1655
    %v1657 = vmul.f32 %v1653, %v63
    %v1658 = vmul.f32 %v1656, %v63
    %v1659 = vmul.f32 %v1647, %v1647
    %v1660 = vmul.f32 %v1648, %v1648
    %v1661 = vsub.f32 %v1657, %v1659
    %v1662 = vsub.f32 %v1658, %v1660
    %v1663 = vsub.f32 %v1635, %v1647
    %v1664 = vsub.f32 %v1636, %v1648
    %v1665 = vadd.f32 %v1661, 1e-05
    %v1666 = vadd.f32 %v1662, 1e-05
    %v1667 = vrsqrt.pop %v1665
    %v1668 = vmul.f32 %v1667, %v1665
    %v1669 = vmul.f32 %v1668, %v1667
    %v1670 = vmul.f32 0.5, %v1669
    %v1671 = vsub.f32 1.5, %v1670
    %v1672 = vmul.f32 %v1667, %v1671
    %vm1673 = vweird.f32 %v1665
    %vm1674 = vweird.f32 %v1667
    %vm1675 = vmor %vm1673, %vm1674
    %v1676 = vsel %vm1675, %v1667, %v1672
    %v1677 = vrsqrt.pop %v1666
    %v1678 = vmul.f32 %v1677, %v1666
    %v1679 = vmul.f32 %v1678, %v1677
    %v1680 = vmul.f32 0.5, %v1679
    %v1681 = vsub.f32 1.5, %v1680
    %v1682 = vmul.f32 %v1677, %v1681
    %vm1683 = vweird.f32 %v1666
    %vm1684 = vweird.f32 %v1677
    %vm1685 = vmor %vm1683, %vm1684
    %v1686 = vsel %vm1685, %v1677, %v1682
    %v1687 = vmul.f32 %v1663, %v1676
    %v1688 = vmul.f32 %v1664, %v1686
    %v1690 = vperm.slane %v1638, 0
    %v1692 = vmul.f32 %v1687, %v1690
    %v1693 = vmul.f32 %v1688, %v1690
    %v1695 = vperm.slane %v1640, 0
    %v1697 = vadd.f32 %v1692, %v1695
    %v1698 = vadd.f32 %v1693, %v1695
    %v1699 = vpack.c.bf16 %v1698, %v1697
    %s1700 = scalar_lea.vmem %s9, 16
    %v1701 = vld [vmem:[%s1700] sm:$0xf]
    %v1702 = vld [vmem:[%s1700 + $0x4] sm:$0xf]
    %v1703 = vld [vmem:[%s1700 + $0x8] sm:$0xf]
    %v1704 = vld [vmem:[%s1700 + $0xc] sm:$0xf]
    %s1705 = scalar_lea.vmem %s10, 1
    %v1706 = vld [vmem:[%s1705] sm:$0x1]
    %v1708 = vperm.slane %v1706, 0
    %v1714 = vunpack.c.l.b16 %v1701
    %v1715 = vunpack.c.l.b16 %v1702
    %v1716 = vunpack.c.l.b16 %v1703
    %v1717 = vunpack.c.l.b16 %v1704
    %v1718 = vpack.c.b16 %v1715, %v1714
    %v1719 = vpack.c.b16 %v1717, %v1716
    %v1723 = vsel %vm50, %v1699, 0
    %1725 = vmatpush.bf16.msra.mxu0 0
    %1726 = vmatpush.bf16.msra.mxu0 0
    %1727 = vmatpush.bf16.msra.mxu0 0
    %1728 = vmatpush.bf16.msra.mxu0 0
    %1729 = vmatpush.bf16.msra.mxu0 0
    %1730 = vmatpush.bf16.msra.mxu0 0
    %1731 = vmatpush.bf16.msra.mxu0 %v1719
    %1732 = vmatpush.bf16.msra.mxu0 %v1718
    %1733 = vmatmul.bf16.gmra.mxu0 %v1723
    %v1734 = vpop.f32.mrf.mxu0
    %v1735 = vadd.f32 %v1708, %v1734
    %v1736 = vpop.f32.mrf.mxu0
    %v1737 = vadd.f32 %v1708, %v1736
    %1738 = vdwg.mxu0
    %v1739 = vmul.f32 %v1735, 0.5
    %v1740 = vmul.f32 %v1737, 0.5
    %v1741 = vmul.f32 %v1735, 0.044715
    %v1742 = vmul.f32 %v1737, 0.044715
    %v1743 = vmul.f32 %v1741, %v1735
    %v1744 = vmul.f32 %v1742, %v1737
    %v1745 = vmul.f32 %v1743, %v1735
    %v1746 = vmul.f32 %v1744, %v1737
    %v1747 = vadd.f32 %v1735, %v1745
    %v1748 = vadd.f32 %v1737, %v1746
    %v1749 = vmul.f32 %v1747, 0.7978846
    %v1750 = vmul.f32 %v1748, 0.7978846
    %v1751 = vtanh.pop %v1749
    %v1752 = vtanh.pop %v1750
    %v1753 = vadd.f32 %v1751, 1.0
    %v1754 = vadd.f32 %v1752, 1.0
    %v1755 = vmul.f32 %v1739, %v1753
    %v1756 = vmul.f32 %v1740, %v1754
    %v1757 = vpack.c.bf16 %v1756, %v1755
    %s1758 = scalar_lea.vmem %s11, 64
    %v1759 = vld [vmem:[%s1758] sm:$0xf]
    %v1760 = vld [vmem:[%s1758 + $0x4] sm:$0xf]
    %v1761 = vld [vmem:[%s1758 + $0x8] sm:$0xf]
    %v1762 = vld [vmem:[%s1758 + $0xc] sm:$0xf]
    %v1763 = vld [vmem:[%s1758 + $0x10] sm:$0xf]
    %v1764 = vld [vmem:[%s1758 + $0x14] sm:$0xf]
    %v1765 = vld [vmem:[%s1758 + $0x18] sm:$0xf]
    %v1766 = vld [vmem:[%s1758 + $0x1c] sm:$0xf]
    %v1767 = vld [vmem:[%s1758 + $0x20] sm:$0xf]
    %v1768 = vld [vmem:[%s1758 + $0x24] sm:$0xf]
    %v1769 = vld [vmem:[%s1758 + $0x28] sm:$0xf]
    %v1770 = vld [vmem:[%s1758 + $0x2c] sm:$0xf]
    %v1771 = vld [vmem:[%s1758 + $0x30] sm:$0xf]
    %v1772 = vld [vmem:[%s1758 + $0x34] sm:$0xf]
    %v1773 = vld [vmem:[%s1758 + $0x38] sm:$0xf]
    %v1774 = vld [vmem:[%s1758 + $0x3c] sm:$0xf]
    %s1775 = scalar_lea.vmem %s12, 1
    %v1776 = vld [vmem:[%s1775] sm:$0x1]
    %v1778 = vperm.slane %v1776, 0
    %v1796 = vunpack.c.l.b16 %v1759
    %v1797 = vunpack.c.l.b16 %v1760
    %v1798 = vunpack.c.l.b16 %v1761
    %v1799 = vunpack.c.l.b16 %v1762
    %v1800 = vunpack.c.l.b16 %v1763
    %v1801 = vunpack.c.l.b16 %v1764
    %v1802 = vunpack.c.l.b16 %v1765
    %v1803 = vunpack.c.l.b16 %v1766
    %v1804 = vunpack.c.l.b16 %v1767
    %v1805 = vunpack.c.l.b16 %v1768
    %v1806 = vunpack.c.l.b16 %v1769
    %v1807 = vunpack.c.l.b16 %v1770
    %v1808 = vunpack.c.l.b16 %v1771
    %v1809 = vunpack.c.l.b16 %v1772
    %v1810 = vunpack.c.l.b16 %v1773
    %v1811 = vunpack.c.l.b16 %v1774
    %v1812 = vpack.c.b16 %v1797, %v1796
    %v1813 = vpack.c.b16 %v1799, %v1798
    %v1814 = vpack.c.b16 %v1801, %v1800
    %v1815 = vpack.c.b16 %v1803, %v1802
    %v1816 = vpack.c.b16 %v1805, %v1804
    %v1817 = vpack.c.b16 %v1807, %v1806
    %v1818 = vpack.c.b16 %v1809, %v1808
    %v1819 = vpack.c.b16 %v1811, %v1810
    %1828 = vmatpush.bf16.msra.mxu0 %v1819
    %1829 = vmatpush.bf16.msra.mxu0 %v1818
    %1830 = vmatpush.bf16.msra.mxu0 %v1817
    %1831 = vmatpush.bf16.msra.mxu0 %v1816
    %1832 = vmatpush.bf16.msra.mxu0 %v1815
    %1833 = vmatpush.bf16.msra.mxu0 %v1814
    %1834 = vmatpush.bf16.msra.mxu0 %v1813
    %1835 = vmatpush.bf16.msra.mxu0 %v1812
    %1836 = vmatmul.bf16.gmra.mxu0 %v1757
    %v1837 = vpop.f32.mrf.mxu0
    %v1838 = vadd.f32 %v1778, %v1837
    %v1839 = vpop.f32.mrf.mxu0
    %v1840 = vadd.f32 %v1778, %v1839
    %1841 = vdwg.mxu0
    %v1842 = vadd.f32 %v1635, %v1838
    %v1843 = vadd.f32 %v1636, %v1840
    %1844 = vst.msk [vmem:[#allocation2] sm:$0xff] %vm50, %v1842
    %1845 = vst.msk [vmem:[#allocation2 + $0x8] sm:$0xff] %vm50, %v1843
    // Predicated region
    $region54: #{simple_decoder.1} parent=1 // pred_check
      _
    $region55: #{simple_decoder.1} parent=1 // pred_check_branch
      %1847 = sbr.rel (0) target = $region57
    $region56: #{simple_decoder.1} parent=1 // pred_region
      %1849 = vsyncadd [#allocation3], 0
      %s1850 = sshll.u32 [#allocation2], 4
      %s1851 = int_to_ptr.vmem [resolvable:$true] %s1850
      %s1852 = sshll.u32 %s13, 4
      %s1853 = int_to_ptr.hbm [resolvable:$true] %s1852
      %1858 = dma.vmem_to_hbm [thread:$0]  %s1851, 256, %s1853, [#allocation3], 128, 128, 8
    $region57: #{simple_decoder.1} parent=1 // pred_fallthru
      _
    // Predicated region
    $region58: #{simple_decoder.1} parent=1 // pred_check
      _
    $region59: #{simple_decoder.1} parent=1 // pred_check_branch
      %1860 = sbr.rel (0) target = $region61
    $region60: #{simple_decoder.1} parent=1 // pred_region
      %1862 = dma.done [#allocation3], 256
    $region61: #{simple_decoder.1} parent=1 // pred_fallthru
      _
    %1863 = vsyncpa [#allocation3], 1

</llo_original>
